<compile_context>
chip_gen: v6e
topology: v6e:2x2x1
jax: 0.10.0
libtpu: 0.0.40
codegen_flags: <defaults>
</compile_context>

<pallas_src>
import jax
import jax.numpy as jnp
from jax.experimental import pallas as pl
from jax.experimental.pallas import tpu as pltpu


# ----------------------------- Fused Pallas kernel ---------------------------

def gcn_net_fused_kernel(a_ref, x_ref,
                         w1_ref, b1_ref, w2_ref, b2_ref, w3_ref, b3_ref,
                         mask_t_ref,
                         fc1_w_ref, fc1_b_ref, fc2_w_ref, fc2_b_ref,
                         o_ref):
    """Whole GCNNet forward on one TensorCore, everything resident in VMEM."""
    a = a_ref[...].astype(jnp.bfloat16)          # (N, N) normalized adjacency

    def gcn_layer(h_bf16, w_ref, b_ref):
        # Aggregate first (N^2 * F_in), then transform (N * F_in * F_out).
        agg = jnp.dot(a, h_bf16, preferred_element_type=jnp.float32)        # (N, F_in)
        out = jnp.dot(agg.astype(jnp.bfloat16),
                      w_ref[...].astype(jnp.bfloat16),
                      preferred_element_type=jnp.float32) + b_ref[...]      # (N, F_out)
        return jnp.maximum(out, 0.0)

    h = x_ref[...].astype(jnp.bfloat16)                                     # (N, F)
    h = gcn_layer(h, w1_ref, b1_ref).astype(jnp.bfloat16)                   # (N, F)
    h = gcn_layer(h, w2_ref, b2_ref).astype(jnp.bfloat16)                   # (N, 2F)
    h = gcn_layer(h, w3_ref, b3_ref)                                        # (N, 4F) f32

    # Global max pool (gmp): additive mask, one 2-D sublane-max per graph.
    mask_t = mask_t_ref[...]                     # (N, B) float 0/1
    num_graphs = mask_t.shape[1]
    neg_big = jnp.float32(1e30)
    rows = []
    for b in range(num_graphs):                  # B is small & static -> unrolled
        col = mask_t[:, b:b + 1]                 # (N, 1)
        masked = h + (col - 1.0) * neg_big       # (N, 4F), -1e30 where node not in graph b
        rows.append(jnp.max(masked, axis=0, keepdims=True))                 # (1, 4F)
    g = jnp.concatenate(rows, axis=0)                                       # (B, 4F)

    # fc_g1 + relu  (dropout is identity at eval)
    g = jnp.dot(g.astype(jnp.bfloat16),
                fc1_w_ref[...].astype(jnp.bfloat16),
                preferred_element_type=jnp.float32) + fc1_b_ref[...]
    g = jnp.maximum(g, 0.0)

    # fc_g2  (dropout is identity at eval)
    g = jnp.dot(g.astype(jnp.bfloat16),
                fc2_w_ref[...].astype(jnp.bfloat16),
                preferred_element_type=jnp.float32) + fc2_b_ref[...]

    o_ref[...] = g.astype(o_ref.dtype)


_VMEM = pl.BlockSpec(memory_space=pltpu.MemorySpace.VMEM)


def gcn_net_forward(params, x, a_hat, pool_mask_t):
    num_graphs = pool_mask_t.shape[1]
    output_dim = params["fc2_w"].shape[1]
    return pl.pallas_call(
        gcn_net_fused_kernel,
        out_shape=jax.ShapeDtypeStruct((num_graphs, output_dim), jnp.float32),
        in_specs=[_VMEM] * 13,
        out_specs=_VMEM,
    )(a_hat, x,
      params["w1"], params["b1"], params["w2"], params["b2"],
      params["w3"], params["b3"],
      pool_mask_t,
      params["fc1_w"], params["fc1_b"], params["fc2_w"], params["fc2_b"])


# --------------------------- Graph preprocessing ----------------------------

def build_norm_adj(edge_index, num_nodes):
    """Dense D^-1/2 (A + I) D^-1/2 from edge_index ([2, E], src row 0, dst row 1)."""
    src, dst = edge_index[0], edge_index[1]
    a = jnp.zeros((num_nodes, num_nodes), jnp.float32)
    a = a.at[dst, src].add(1.0)                      # message flow src -> dst
    a = a + jnp.eye(num_nodes, dtype=jnp.float32)    # self loops
    deg = jnp.sum(a, axis=1)                         # in-degree incl. self loop
    d_inv_sqrt = jnp.where(deg > 0, 1.0 / jnp.sqrt(deg), 0.0)
    return a * d_inv_sqrt[:, None] * d_inv_sqrt[None, :]


def build_pool_mask_t(batch, num_graphs):
    # (N, B) float mask: mask[n, b] = 1 if node n belongs to graph b.
    return (batch[:, None] == jnp.arange(num_graphs)[None, :]).astype(jnp.float32)


# ------------------------------ Param init -----------------------------------

def glorot(key, shape):
    fan_in, fan_out = shape
    lim = jnp.sqrt(6.0 / (fan_in + fan_out))
    return jax.random.uniform(key, shape, jnp.float32, -lim, lim)


def init_params(key, num_features_xd, hidden_fc, output_dim):
    ks = jax.random.split(key, 10)
    f0 = num_features_xd
    # Biases pre-reshaped to (1, F) so the kernel adds them directly.
    return {
        "w1": glorot(ks[0], (f0, f0)),
        "b1": jnp.zeros((1, f0), jnp.float32),
        "w2": glorot(ks[1], (f0, f0 * 2)),
        "b2": jnp.zeros((1, f0 * 2), jnp.float32),
        "w3": glorot(ks[2], (f0 * 2, f0 * 4)),
        "b3": jnp.zeros((1, f0 * 4), jnp.float32),
        "fc1_w": glorot(ks[3], (f0 * 4, hidden_fc)),
        "fc1_b": 0.01 * jax.random.normal(ks[4], (1, hidden_fc), jnp.float32),
        "fc2_w": glorot(ks[5], (hidden_fc, output_dim)),
        "fc2_b": 0.01 * jax.random.normal(ks[6], (1, output_dim), jnp.float32),
    }


# --------------------------------- Main --------------------------------------

if __name__ == "__main__":
    # Small, TPU-friendly sizes (constructor args of GCNNet):
    NUM_FEATURES_XD = 32      # num_features_xd
    OUTPUT_DIM = 128          # output_dim
    HIDDEN_FC = 1024          # fc_g1 hidden size (hard-coded in the module)

    N_NODES = 64              # total nodes across the batch of graphs
    N_GRAPHS = 2              # number of graphs in the batch
    N_EDGES = 128

    key = jax.random.PRNGKey(0)
    k_x, k_src, k_dst, k_params = jax.random.split(key, 4)

    # data.x
    x = jax.random.normal(k_x, (N_NODES, NUM_FEATURES_XD), jnp.float32)
    # data.edge_index ([2, E])
    src = jax.random.randint(k_src, (N_EDGES,), 0, N_NODES)
    dst = jax.random.randint(k_dst, (N_EDGES,), 0, N_NODES)
    edge_index = jnp.stack([src, dst], axis=0)
    # data.batch (first half -> graph 0, second half -> graph 1)
    batch = jnp.concatenate([
        jnp.zeros((N_NODES // 2,), jnp.int32),
        jnp.ones((N_NODES - N_NODES // 2,), jnp.int32),
    ])

    a_hat = build_norm_adj(edge_index, N_NODES)
    pool_mask_t = build_pool_mask_t(batch, N_GRAPHS)
    params = init_params(k_params, NUM_FEATURES_XD, HIDDEN_FC, OUTPUT_DIM)

    out = gcn_net_forward(params, x, a_hat, pool_mask_t)
    out = jax.block_until_ready(out)

    assert out.shape == (N_GRAPHS, OUTPUT_DIM), out.shape
    assert bool(jnp.all(jnp.isfinite(out)))
    print("KERNEL_OK")
</pallas_src>

<mosaic_0001>
module attributes {stable_mosaic.version = 11 : i64} {
  func.func @gcn_net_fused_kernel(%arg0: memref<64x64xf32, #tpu.memory_space<vmem>>, %arg1: memref<64x32xf32, #tpu.memory_space<vmem>>, %arg2: memref<32x32xf32, #tpu.memory_space<vmem>>, %arg3: memref<1x32xf32, #tpu.memory_space<vmem>>, %arg4: memref<32x64xf32, #tpu.memory_space<vmem>>, %arg5: memref<1x64xf32, #tpu.memory_space<vmem>>, %arg6: memref<64x128xf32, #tpu.memory_space<vmem>>, %arg7: memref<1x128xf32, #tpu.memory_space<vmem>>, %arg8: memref<64x2xf32, #tpu.memory_space<vmem>>, %arg9: memref<128x1024xf32, #tpu.memory_space<vmem>>, %arg10: memref<1x1024xf32, #tpu.memory_space<vmem>>, %arg11: memref<1024x128xf32, #tpu.memory_space<vmem>>, %arg12: memref<1x128xf32, #tpu.memory_space<vmem>>, %arg13: memref<2x128xf32, #tpu.memory_space<vmem>>) attributes {dimension_semantics = [], scalar_prefetch = 0 : i64, scratch_operands = 0 : i64, tpu.core_type = #tpu.core_type<tc>} {
    %c0 = arith.constant 0 : index
    %c0_0 = arith.constant 0 : index
    %0 = vector.load %arg0[%c0, %c0_0] : memref<64x64xf32, #tpu.memory_space<vmem>>, vector<64x64xf32>
    %1 = arith.truncf %0 : vector<64x64xf32> to vector<64x64xbf16>
    %c0_1 = arith.constant 0 : index
    %c0_2 = arith.constant 0 : index
    %2 = vector.load %arg1[%c0_1, %c0_2] : memref<64x32xf32, #tpu.memory_space<vmem>>, vector<64x32xf32>
    %3 = arith.truncf %2 : vector<64x32xf32> to vector<64x32xbf16>
    %cst = arith.constant dense<0.000000e+00> : vector<64x32xf32>
    %4 = tpu.matmul %1, %3, %cst {dimension_numbers = #tpu.dot_dimension_numbers<[1], [0], [0], [1], [0, 0, 1, 1], [], []>} : vector<64x64xbf16>, vector<64x32xbf16>, vector<64x32xf32> -> vector<64x32xf32>
    %5 = arith.truncf %4 : vector<64x32xf32> to vector<64x32xbf16>
    %c0_3 = arith.constant 0 : index
    %c0_4 = arith.constant 0 : index
    %6 = vector.load %arg2[%c0_3, %c0_4] : memref<32x32xf32, #tpu.memory_space<vmem>>, vector<32x32xf32>
    %7 = arith.truncf %6 : vector<32x32xf32> to vector<32x32xbf16>
    %cst_5 = arith.constant dense<0.000000e+00> : vector<64x32xf32>
    %8 = tpu.matmul %5, %7, %cst_5 {dimension_numbers = #tpu.dot_dimension_numbers<[1], [0], [0], [1], [0, 0, 1, 1], [], []>} : vector<64x32xbf16>, vector<32x32xbf16>, vector<64x32xf32> -> vector<64x32xf32>
    %c0_6 = arith.constant 0 : index
    %c0_7 = arith.constant 0 : index
    %9 = vector.load %arg3[%c0_6, %c0_7] : memref<1x32xf32, #tpu.memory_space<vmem>>, vector<1x32xf32>
    %10 = vector.broadcast %9 : vector<1x32xf32> to vector<64x32xf32>
    %11 = arith.addf %8, %10 : vector<64x32xf32>
    %cst_8 = arith.constant 0.000000e+00 : f32
    %12 = vector.broadcast %cst_8 : f32 to vector<64x32xf32>
    %13 = arith.maximumf %11, %12 : vector<64x32xf32>
    %14 = arith.truncf %13 : vector<64x32xf32> to vector<64x32xbf16>
    %cst_9 = arith.constant dense<0.000000e+00> : vector<64x32xf32>
    %15 = tpu.matmul %1, %14, %cst_9 {dimension_numbers = #tpu.dot_dimension_numbers<[1], [0], [0], [1], [0, 0, 1, 1], [], []>} : vector<64x64xbf16>, vector<64x32xbf16>, vector<64x32xf32> -> vector<64x32xf32>
    %16 = arith.truncf %15 : vector<64x32xf32> to vector<64x32xbf16>
    %c0_10 = arith.constant 0 : index
    %c0_11 = arith.constant 0 : index
    %17 = vector.load %arg4[%c0_10, %c0_11] : memref<32x64xf32, #tpu.memory_space<vmem>>, vector<32x64xf32>
    %18 = arith.truncf %17 : vector<32x64xf32> to vector<32x64xbf16>
    %cst_12 = arith.constant dense<0.000000e+00> : vector<64x64xf32>
    %19 = tpu.matmul %16, %18, %cst_12 {dimension_numbers = #tpu.dot_dimension_numbers<[1], [0], [0], [1], [0, 0, 1, 1], [], []>} : vector<64x32xbf16>, vector<32x64xbf16>, vector<64x64xf32> -> vector<64x64xf32>
    %c0_13 = arith.constant 0 : index
    %c0_14 = arith.constant 0 : index
    %20 = vector.load %arg5[%c0_13, %c0_14] : memref<1x64xf32, #tpu.memory_space<vmem>>, vector<1x64xf32>
    %21 = vector.broadcast %20 : vector<1x64xf32> to vector<64x64xf32>
    %22 = arith.addf %19, %21 : vector<64x64xf32>
    %cst_15 = arith.constant 0.000000e+00 : f32
    %23 = vector.broadcast %cst_15 : f32 to vector<64x64xf32>
    %24 = arith.maximumf %22, %23 : vector<64x64xf32>
    %25 = arith.truncf %24 : vector<64x64xf32> to vector<64x64xbf16>
    %cst_16 = arith.constant dense<0.000000e+00> : vector<64x64xf32>
    %26 = tpu.matmul %1, %25, %cst_16 {dimension_numbers = #tpu.dot_dimension_numbers<[1], [0], [0], [1], [0, 0, 1, 1], [], []>} : vector<64x64xbf16>, vector<64x64xbf16>, vector<64x64xf32> -> vector<64x64xf32>
    %27 = arith.truncf %26 : vector<64x64xf32> to vector<64x64xbf16>
    %c0_17 = arith.constant 0 : index
    %c0_18 = arith.constant 0 : index
    %28 = vector.load %arg6[%c0_17, %c0_18] : memref<64x128xf32, #tpu.memory_space<vmem>>, vector<64x128xf32>
    %29 = arith.truncf %28 : vector<64x128xf32> to vector<64x128xbf16>
    %cst_19 = arith.constant dense<0.000000e+00> : vector<64x128xf32>
    %30 = tpu.matmul %27, %29, %cst_19 {dimension_numbers = #tpu.dot_dimension_numbers<[1], [0], [0], [1], [0, 0, 1, 1], [], []>} : vector<64x64xbf16>, vector<64x128xbf16>, vector<64x128xf32> -> vector<64x128xf32>
    %c0_20 = arith.constant 0 : index
    %c0_21 = arith.constant 0 : index
    %31 = vector.load %arg7[%c0_20, %c0_21] : memref<1x128xf32, #tpu.memory_space<vmem>>, vector<1x128xf32>
    %32 = vector.broadcast %31 : vector<1x128xf32> to vector<64x128xf32>
    %33 = arith.addf %30, %32 : vector<64x128xf32>
    %cst_22 = arith.constant 0.000000e+00 : f32
    %34 = vector.broadcast %cst_22 : f32 to vector<64x128xf32>
    %35 = arith.maximumf %33, %34 : vector<64x128xf32>
    %c0_23 = arith.constant 0 : index
    %c0_24 = arith.constant 0 : index
    %36 = vector.load %arg8[%c0_23, %c0_24] : memref<64x2xf32, #tpu.memory_space<vmem>>, vector<64x2xf32>
    %37 = vector.extract_strided_slice %36 {offsets = [0, 0], sizes = [64, 1], strides = [1, 1]} : vector<64x2xf32> to vector<64x1xf32>
    %cst_25 = arith.constant 1.000000e+00 : f32
    %38 = vector.broadcast %cst_25 : f32 to vector<64x1xf32>
    %39 = arith.subf %37, %38 : vector<64x1xf32>
    %cst_26 = arith.constant 1.000000e+30 : f32
    %40 = vector.broadcast %cst_26 : f32 to vector<64x1xf32>
    %41 = arith.mulf %39, %40 : vector<64x1xf32>
    %42 = vector.broadcast %41 : vector<64x1xf32> to vector<64x128xf32>
    %43 = arith.addf %35, %42 : vector<64x128xf32>
    %cst_27 = arith.constant dense<0xFF800000> : vector<128xf32>
    %44 = vector.multi_reduction <maximumf>, %43, %cst_27 [0] : vector<64x128xf32> to vector<128xf32>
    %45 = vector.shape_cast %44 : vector<128xf32> to vector<1x128xf32>
    %46 = vector.extract_strided_slice %36 {offsets = [0, 1], sizes = [64, 1], strides = [1, 1]} : vector<64x2xf32> to vector<64x1xf32>
    %cst_28 = arith.constant 1.000000e+00 : f32
    %47 = vector.broadcast %cst_28 : f32 to vector<64x1xf32>
    %48 = arith.subf %46, %47 : vector<64x1xf32>
    %cst_29 = arith.constant 1.000000e+30 : f32
    %49 = vector.broadcast %cst_29 : f32 to vector<64x1xf32>
    %50 = arith.mulf %48, %49 : vector<64x1xf32>
    %51 = vector.broadcast %50 : vector<64x1xf32> to vector<64x128xf32>
    %52 = arith.addf %35, %51 : vector<64x128xf32>
    %cst_30 = arith.constant dense<0xFF800000> : vector<128xf32>
    %53 = vector.multi_reduction <maximumf>, %52, %cst_30 [0] : vector<64x128xf32> to vector<128xf32>
    %54 = vector.shape_cast %53 : vector<128xf32> to vector<1x128xf32>
    %55 = tpu.concatenate %45, %54 in 0 : vector<1x128xf32>, vector<1x128xf32> -> vector<2x128xf32>
    %56 = arith.truncf %55 : vector<2x128xf32> to vector<2x128xbf16>
    %c0_31 = arith.constant 0 : index
    %c0_32 = arith.constant 0 : index
    %57 = vector.load %arg9[%c0_31, %c0_32] : memref<128x1024xf32, #tpu.memory_space<vmem>>, vector<128x1024xf32>
    %58 = arith.truncf %57 : vector<128x1024xf32> to vector<128x1024xbf16>
    %cst_33 = arith.constant dense<0.000000e+00> : vector<2x1024xf32>
    %59 = tpu.matmul %56, %58, %cst_33 {dimension_numbers = #tpu.dot_dimension_numbers<[1], [0], [0], [1], [0, 0, 1, 1], [], []>} : vector<2x128xbf16>, vector<128x1024xbf16>, vector<2x1024xf32> -> vector<2x1024xf32>
    %c0_34 = arith.constant 0 : index
    %c0_35 = arith.constant 0 : index
    %60 = vector.load %arg10[%c0_34, %c0_35] : memref<1x1024xf32, #tpu.memory_space<vmem>>, vector<1x1024xf32>
    %61 = vector.broadcast %60 : vector<1x1024xf32> to vector<2x1024xf32>
    %62 = arith.addf %59, %61 : vector<2x1024xf32>
    %cst_36 = arith.constant 0.000000e+00 : f32
    %63 = vector.broadcast %cst_36 : f32 to vector<2x1024xf32>
    %64 = arith.maximumf %62, %63 : vector<2x1024xf32>
    %65 = arith.truncf %64 : vector<2x1024xf32> to vector<2x1024xbf16>
    %c0_37 = arith.constant 0 : index
    %c0_38 = arith.constant 0 : index
    %66 = vector.load %arg11[%c0_37, %c0_38] : memref<1024x128xf32, #tpu.memory_space<vmem>>, vector<1024x128xf32>
    %67 = arith.truncf %66 : vector<1024x128xf32> to vector<1024x128xbf16>
    %cst_39 = arith.constant dense<0.000000e+00> : vector<2x128xf32>
    %68 = tpu.matmul %65, %67, %cst_39 {dimension_numbers = #tpu.dot_dimension_numbers<[1], [0], [0], [1], [0, 0, 1, 1], [], []>} : vector<2x1024xbf16>, vector<1024x128xbf16>, vector<2x128xf32> -> vector<2x128xf32>
    %c0_40 = arith.constant 0 : index
    %c0_41 = arith.constant 0 : index
    %69 = vector.load %arg12[%c0_40, %c0_41] : memref<1x128xf32, #tpu.memory_space<vmem>>, vector<1x128xf32>
    %70 = vector.broadcast %69 : vector<1x128xf32> to vector<2x128xf32>
    %71 = arith.addf %68, %70 : vector<2x128xf32>
    %c0_42 = arith.constant 0 : index
    %c0_43 = arith.constant 0 : index
    %72 = vector.load %arg13[%c0_42, %c0_43] : memref<2x128xf32, #tpu.memory_space<vmem>>, vector<2x128xf32>
    tpu.vector_store %arg13[%c0_42, %c0_43], %71 {strides = array<i32>} : memref<2x128xf32, #tpu.memory_space<vmem>>, vector<2x128xf32>,
    return
  }
}

</mosaic_0001>

<llo_original>
// kernel: tpu_custom_call.1
$region0: #{tpu_custom_call.1}
  #allocation0 [shape = 'u32[]', space=smem, size = 0x4, offset = 0x4, fixed_abs, tag = 'smem constant byte address 0x4 - core index']
  #allocation1 [shape = 'u32[144,128]{1,0:T(1,128)}', space=vmem, size = 0x12000, scoped, tag = 'internal scratch']
  %s0 = inlined_call_operand.vmem [shape: f32[64,64], index: 0, kind: input, shape index: {}]
  %s1 = inlined_call_operand.vmem [shape: f32[64,32], index: 1, kind: input, shape index: {}]
  %s2 = inlined_call_operand.vmem [shape: f32[32,32], index: 2, kind: input, shape index: {}]
  %s3 = inlined_call_operand.vmem [shape: f32[1,32], index: 3, kind: input, shape index: {}]
  %s4 = inlined_call_operand.hbm [shape: f32[32,64], index: 4, kind: input, shape index: {}]
  %s5 = inlined_call_operand.hbm [shape: f32[1,64], index: 5, kind: input, shape index: {}]
  %s6 = inlined_call_operand.vmem [shape: f32[64,128], index: 6, kind: input, shape index: {}]
  %s7 = inlined_call_operand.vmem [shape: f32[1,128], index: 7, kind: input, shape index: {}]
  %s8 = inlined_call_operand.vmem [shape: f32[64,2], index: 8, kind: input, shape index: {}]
  %s9 = inlined_call_operand.hbm [shape: f32[128,1024], index: 9, kind: input, shape index: {}]
  %s10 = inlined_call_operand.vmem [shape: f32[1,1024], index: 10, kind: input, shape index: {}]
  %s11 = inlined_call_operand.hbm [shape: f32[1024,128], index: 11, kind: input, shape index: {}]
  %s12 = inlined_call_operand.vmem [shape: f32[1,128], index: 12, kind: input, shape index: {}]
  %s13 = inlined_call_operand.hbm [shape: f32[2,128], index: 13, kind: output, shape index: {}]
  %s14 = sld [smem:[#allocation0]]
  $region78: #{tpu_custom_call.1} parent=0
    _
  %s16 = ssub.s32 1, %s14
  %s17 = scalar_select 0, %s16, %s14
  $region1: #{tpu_custom_call.1} parent=0
    #allocation2 [shape = 'u8[16384]{0}', space=vmem, size = 0x4000, scoped, tag = 'input window, operand 4, single buffered']
    #allocation3 [shape = 's32[1]{0}', space=sflag, size = 0x4, scoped, tag = 'scoped memory for tpu_custom_call.1']
    #allocation4 [shape = 's32[1]{0}', space=sflag, size = 0x4, scoped, tag = 'scoped memory for tpu_custom_call.1']
    #allocation5 [shape = 'u8[512]{0}', space=vmem, size = 0x400, scoped, tag = 'input window, operand 5, single buffered']
    #allocation6 [shape = 's32[1]{0}', space=sflag, size = 0x4, scoped, tag = 'scoped memory for tpu_custom_call.1']
    #allocation7 [shape = 'u8[524288]{0}', space=vmem, size = 0x80000, scoped, tag = 'input window, operand 9, single buffered']
    #allocation8 [shape = 'u8[524288]{0}', space=vmem, size = 0x80000, scoped, tag = 'input window, operand 11, single buffered']
    #allocation9 [shape = 's32[1]{0}', space=sflag, size = 0x4, scoped, tag = 'scoped memory for tpu_custom_call.1']
    #allocation10 [shape = 'u8[1024]{0}', space=vmem, size = 0x400, scoped, tag = 'output window, operand 0, single buffered']
    %18 = vsyncpa [#allocation3], 0
    %19 = vsyncpa [#allocation6], 0
    %20 = vsyncpa [#allocation9], 0
    %21 = vsyncpa [#allocation4], 0
    // Predicated region
    $region2: #{tpu_custom_call.1} parent=1 // pred_check
      _
    $region3: #{tpu_custom_call.1} parent=1 // pred_check_branch
      %23 = sbr.rel (0) target = $region5
    $region4: #{tpu_custom_call.1} parent=1 // pred_region
      _
    $region5: #{tpu_custom_call.1} parent=1 // pred_fallthru
      _
    // Predicated region
    $region6: #{tpu_custom_call.1} parent=1 // pred_check
      _
    $region7: #{tpu_custom_call.1} parent=1 // pred_check_branch
      %25 = sbr.rel (0) target = $region9
    $region8: #{tpu_custom_call.1} parent=1 // pred_region
      _
    $region9: #{tpu_custom_call.1} parent=1 // pred_fallthru
      _
    // Predicated region
    $region10: #{tpu_custom_call.1} parent=1 // pred_check
      _
    $region11: #{tpu_custom_call.1} parent=1 // pred_check_branch
      %27 = sbr.rel (0) target = $region13
    $region12: #{tpu_custom_call.1} parent=1 // pred_region
      _
    $region13: #{tpu_custom_call.1} parent=1 // pred_fallthru
      _
    // Predicated region
    $region14: #{tpu_custom_call.1} parent=1 // pred_check
      _
    $region15: #{tpu_custom_call.1} parent=1 // pred_check_branch
      %29 = sbr.rel (0) target = $region17
    $region16: #{tpu_custom_call.1} parent=1 // pred_region
      _
    $region17: #{tpu_custom_call.1} parent=1 // pred_fallthru
      _
    // Predicated region
    $region18: #{tpu_custom_call.1} parent=1 // pred_check
      _
    $region19: #{tpu_custom_call.1} parent=1 // pred_check_branch
      %31 = sbr.rel (0) target = $region21
    $region20: #{tpu_custom_call.1} parent=1 // pred_region
      %s33 = ssub.s32 512, 512
      %34 = vsyncadd [#allocation3], %s33
      %s35 = sshll.u32 [#allocation2], 4
      %s36 = int_to_ptr.vmem [resolvable:$true] %s35
      %41 = dma.hbm_to_vmem [thread:$0]  %s4, 512, %s36, [#allocation3], 128, 128, 8
    $region21: #{tpu_custom_call.1} parent=1 // pred_fallthru
      _
    // Predicated region
    $region22: #{tpu_custom_call.1} parent=1 // pred_check
      _
    $region23: #{tpu_custom_call.1} parent=1 // pred_check_branch
      %43 = sbr.rel (0) target = $region25
    $region24: #{tpu_custom_call.1} parent=1 // pred_region
      %s45 = ssub.s32 16, 16
      %46 = vsyncadd [#allocation6], %s45
      %s48 = sshll.u32 [#allocation5], 4
      %s49 = int_to_ptr.vmem [resolvable:$true] %s48
      %51 = dma.hbm_to_vmem [thread:$0]  %s5, 16, %s49, [#allocation6]
    $region25: #{tpu_custom_call.1} parent=1 // pred_fallthru
      _
    // Predicated region
    $region26: #{tpu_custom_call.1} parent=1 // pred_check
      _
    $region27: #{tpu_custom_call.1} parent=1 // pred_check_branch
      %53 = sbr.rel (0) target = $region29
    $region28: #{tpu_custom_call.1} parent=1 // pred_region
      _
    $region29: #{tpu_custom_call.1} parent=1 // pred_fallthru
      _
    // Predicated region
    $region30: #{tpu_custom_call.1} parent=1 // pred_check
      _
    $region31: #{tpu_custom_call.1} parent=1 // pred_check_branch
      %55 = sbr.rel (0) target = $region33
    $region32: #{tpu_custom_call.1} parent=1 // pred_region
      _
    $region33: #{tpu_custom_call.1} parent=1 // pred_fallthru
      _
    // Predicated region
    $region34: #{tpu_custom_call.1} parent=1 // pred_check
      _
    $region35: #{tpu_custom_call.1} parent=1 // pred_check_branch
      %57 = sbr.rel (0) target = $region37
    $region36: #{tpu_custom_call.1} parent=1 // pred_region
      _
    $region37: #{tpu_custom_call.1} parent=1 // pred_fallthru
      _
    // Predicated region
    $region38: #{tpu_custom_call.1} parent=1 // pred_check
      _
    $region39: #{tpu_custom_call.1} parent=1 // pred_check_branch
      %59 = sbr.rel (0) target = $region41
    $region40: #{tpu_custom_call.1} parent=1 // pred_region
      %s61 = ssub.s32 16384, 16384
      %62 = vsyncadd [#allocation6], %s61
      %s63 = sshll.u32 [#allocation7], 4
      %s64 = int_to_ptr.vmem [resolvable:$true] %s63
      %69 = dma.hbm_to_vmem [thread:$0]  %s9, 16384, %s64, [#allocation6], 1024, 1024, 64
    $region41: #{tpu_custom_call.1} parent=1 // pred_fallthru
      _
    // Predicated region
    $region42: #{tpu_custom_call.1} parent=1 // pred_check
      _
    $region43: #{tpu_custom_call.1} parent=1 // pred_check_branch
      %71 = sbr.rel (0) target = $region45
    $region44: #{tpu_custom_call.1} parent=1 // pred_region
      _
    $region45: #{tpu_custom_call.1} parent=1 // pred_fallthru
      _
    // Predicated region
    $region46: #{tpu_custom_call.1} parent=1 // pred_check
      _
    $region47: #{tpu_custom_call.1} parent=1 // pred_check_branch
      %73 = sbr.rel (0) target = $region49
    $region48: #{tpu_custom_call.1} parent=1 // pred_region
      %s75 = ssub.s32 16384, 16384
      %76 = vsyncadd [#allocation9], %s75
      %s77 = sshll.u32 [#allocation8], 4
      %s78 = int_to_ptr.vmem [resolvable:$true] %s77
      %83 = dma.hbm_to_vmem [thread:$0]  %s11, 16384, %s78, [#allocation9], 128, 128, 8
    $region49: #{tpu_custom_call.1} parent=1 // pred_fallthru
      _
    // Predicated region
    $region50: #{tpu_custom_call.1} parent=1 // pred_check
      _
    $region51: #{tpu_custom_call.1} parent=1 // pred_check_branch
      %85 = sbr.rel (0) target = $region53
    $region52: #{tpu_custom_call.1} parent=1 // pred_region
      _
    $region53: #{tpu_custom_call.1} parent=1 // pred_fallthru
      _
    // Predicated region
    $region54: #{tpu_custom_call.1} parent=1 // pred_check
      _
    $region55: #{tpu_custom_call.1} parent=1 // pred_check_branch
      %87 = sbr.rel (0) target = $region57
    $region56: #{tpu_custom_call.1} parent=1 // pred_region
      %88 = dma.done [#allocation3], 512
    $region57: #{tpu_custom_call.1} parent=1 // pred_fallthru
      _
    // Predicated region
    $region58: #{tpu_custom_call.1} parent=1 // pred_check
      _
    $region59: #{tpu_custom_call.1} parent=1 // pred_check_branch
      %90 = sbr.rel (0) target = $region61
    $region60: #{tpu_custom_call.1} parent=1 // pred_region
      %91 = dma.done [#allocation6], 16
    $region61: #{tpu_custom_call.1} parent=1 // pred_fallthru
      _
    // Predicated region
    $region62: #{tpu_custom_call.1} parent=1 // pred_check
      _
    $region63: #{tpu_custom_call.1} parent=1 // pred_check_branch
      %93 = sbr.rel (0) target = $region65
    $region64: #{tpu_custom_call.1} parent=1 // pred_region
      %94 = dma.done [#allocation6], 16384
    $region65: #{tpu_custom_call.1} parent=1 // pred_fallthru
      _
    // Predicated region
    $region66: #{tpu_custom_call.1} parent=1 // pred_check
      _
    $region67: #{tpu_custom_call.1} parent=1 // pred_check_branch
      %96 = sbr.rel (0) target = $region69
    $region68: #{tpu_custom_call.1} parent=1 // pred_region
      %97 = dma.done [#allocation9], 16384
    $region69: #{tpu_custom_call.1} parent=1 // pred_fallthru
      _
    %v99 = vld [vmem:[%s0] sm:$0xff]
    %v100 = vld [vmem:[%s0 + $0x8] sm:$0xff]
    %v101 = vld [vmem:[%s0 + $0x10] sm:$0xff]
    %v102 = vld [vmem:[%s0 + $0x18] sm:$0xff]
    %v103 = vld [vmem:[%s0 + $0x20] sm:$0xff]
    %v104 = vld [vmem:[%s0 + $0x28] sm:$0xff]
    %v105 = vld [vmem:[%s0 + $0x30] sm:$0xff]
    %v106 = vld [vmem:[%s0 + $0x38] sm:$0xff]
    %v107 = vpack.c.bf16 %v100, %v99
    %v108 = vpack.c.bf16 %v102, %v101
    %v109 = vpack.c.bf16 %v104, %v103
    %v110 = vpack.c.bf16 %v106, %v105
    %v111 = vld [vmem:[%s1] sm:$0xff]
    %v112 = vld [vmem:[%s1 + $0x8] sm:$0xff]
    %v113 = vld [vmem:[%s1 + $0x10] sm:$0xff]
    %v114 = vld [vmem:[%s1 + $0x18] sm:$0xff]
    %v115 = vld [vmem:[%s1 + $0x20] sm:$0xff]
    %v116 = vld [vmem:[%s1 + $0x28] sm:$0xff]
    %v117 = vld [vmem:[%s1 + $0x30] sm:$0xff]
    %v118 = vld [vmem:[%s1 + $0x38] sm:$0xff]
    %v119 = vpack.c.bf16 %v112, %v111
    %v120 = vpack.c.bf16 %v114, %v113
    %v121 = vpack.c.bf16 %v116, %v115
    %v122 = vpack.c.bf16 %v118, %v117
    %vm123 = vcmask 523264
    %v125 = vsel %vm123, %v107, 0
    %v128 = vsel %vm123, %v108, 0
    %v131 = vsel %vm123, %v109, 0
    %v134 = vsel %vm123, %v110, 0
    %136 = vmatprep.subr.bf16.mxu0 0
    %137 = vmatpush1.bf16.msra.mxu0 0
    %138 = vmatprep.subr.bf16.mxu0 0
    %139 = vmatpush1.bf16.msra.mxu0 0
    %140 = vmatprep.subr.bf16.mxu0 0
    %141 = vmatpush1.bf16.msra.mxu0 0
    %142 = vmatprep.subr.bf16.mxu0 0
    %143 = vmatpush1.bf16.msra.mxu0 0
    %144 = vmatprep.subr.bf16.mxu0 0
    %145 = vmatpush1.bf16.msra.mxu0 %v122
    %146 = vmatprep.subr.bf16.mxu0 0
    %147 = vmatpush1.bf16.msra.mxu0 %v121
    %148 = vmatprep.subr.bf16.mxu0 0
    %149 = vmatpush1.bf16.msra.mxu0 %v120
    %150 = vmatprep.subr.bf16.mxu0 0
    %151 = vmatpush1.bf16.msra.mxu0 %v119
    %152 = vmatprep.subr.bf16.mxu0 0
    %153 = vmatpush2.bf16.msra.mxu0 0
    %154 = vmatprep.subr.bf16.mxu0 0
    %155 = vmatpush2.bf16.msra.mxu0 0
    %156 = vmatprep.subr.bf16.mxu0 0
    %157 = vmatpush2.bf16.msra.mxu0 0
    %158 = vmatprep.subr.bf16.mxu0 0
    %159 = vmatpush2.bf16.msra.mxu0 0
    %160 = vmatprep.subr.bf16.mxu0 0
    %161 = vmatpush2.bf16.msra.mxu0 0
    %162 = vmatprep.subr.bf16.mxu0 0
    %163 = vmatpush2.bf16.msra.mxu0 0
    %164 = vmatprep.subr.bf16.mxu0 0
    %165 = vmatpush2.bf16.msra.mxu0 0
    %166 = vmatprep.subr.bf16.mxu0 0
    %167 = vmatpush2.bf16.msra.mxu0 0
    %168 = vmatprep.mubr.bf16.mxu0 0
    %169 = vmatmul.mubr.bf16.gmra.mxu0 %v125
    %v170 = vpop.f32.mrf.mxu0
    %v171 = vadd.f32 0.0, %v170
    %v172 = vpop.f32.mrf.mxu0
    %v173 = vpop.f32.mrf.mxu0
    %v174 = vadd.f32 0.0, %v173
    %v175 = vpop.f32.mrf.mxu0
    %176 = vmatprep.mubr.bf16.mxu0 0
    %177 = vmatmul.mubr.bf16.gmra.mxu0 %v128
    %v178 = vpop.f32.mrf.mxu0
    %v179 = vadd.f32 0.0, %v178
    %v180 = vpop.f32.mrf.mxu0
    %v181 = vpop.f32.mrf.mxu0
    %v182 = vadd.f32 0.0, %v181
    %v183 = vpop.f32.mrf.mxu0
    %184 = vmatprep.mubr.bf16.mxu0 0
    %185 = vmatmul.mubr.bf16.gmra.mxu0 %v131
    %v186 = vpop.f32.mrf.mxu0
    %v187 = vadd.f32 0.0, %v186
    %v188 = vpop.f32.mrf.mxu0
    %v189 = vpop.f32.mrf.mxu0
    %v190 = vadd.f32 0.0, %v189
    %v191 = vpop.f32.mrf.mxu0
    %192 = vmatprep.mubr.bf16.mxu0 0
    %193 = vmatmul.mubr.bf16.gmra.mxu0 %v134
    %v194 = vpop.f32.mrf.mxu0
    %v195 = vadd.f32 0.0, %v194
    %v196 = vpop.f32.mrf.mxu0
    %v197 = vpop.f32.mrf.mxu0
    %v198 = vadd.f32 0.0, %v197
    %v199 = vpop.f32.mrf.mxu0
    %200 = vdwg.mxu0
    %v201 = vpack.c.bf16 %v174, %v171
    %v202 = vpack.c.bf16 %v182, %v179
    %v203 = vpack.c.bf16 %v190, %v187
    %v204 = vpack.c.bf16 %v198, %v195
    %v205 = vld [vmem:[%s2] sm:$0xff]
    %v206 = vld [vmem:[%s2 + $0x8] sm:$0xff]
    %v207 = vld [vmem:[%s2 + $0x10] sm:$0xff]
    %v208 = vld [vmem:[%s2 + $0x18] sm:$0xff]
    %v209 = vpack.c.bf16 %v206, %v205
    %v210 = vpack.c.bf16 %v208, %v207
    %v211 = vld [vmem:[%s3] sm:$0x1]
    %v213 = vlaneseq
    %v214 = vshrl.u32 %v213, 7
    %v215 = vsub.s32 0, %v214
    %v216 = vrot.slane %v211, %v215
    %vm218 = vcmask 261120
    %v220 = vsel %vm218, %v201, 0
    %v223 = vsel %vm218, %v202, 0
    %v226 = vsel %vm218, %v203, 0
    %v229 = vsel %vm218, %v204, 0
    %231 = vmatprep.subr.bf16.mxu0 0
    %232 = vmatpush1.bf16.msra.mxu0 0
    %233 = vmatprep.subr.bf16.mxu0 0
    %234 = vmatpush1.bf16.msra.mxu0 0
    %235 = vmatprep.subr.bf16.mxu0 0
    %236 = vmatpush1.bf16.msra.mxu0 0
    %237 = vmatprep.subr.bf16.mxu0 0
    %238 = vmatpush1.bf16.msra.mxu0 0
    %239 = vmatprep.subr.bf16.mxu0 0
    %240 = vmatpush1.bf16.msra.mxu0 0
    %241 = vmatprep.subr.bf16.mxu0 0
    %242 = vmatpush1.bf16.msra.mxu0 0
    %243 = vmatprep.subr.bf16.mxu0 0
    %244 = vmatpush1.bf16.msra.mxu0 %v210
    %245 = vmatprep.subr.bf16.mxu0 0
    %246 = vmatpush1.bf16.msra.mxu0 %v209
    %247 = vmatprep.subr.bf16.mxu0 0
    %248 = vmatpush2.bf16.msra.mxu0 0
    %249 = vmatprep.subr.bf16.mxu0 0
    %250 = vmatpush2.bf16.msra.mxu0 0
    %251 = vmatprep.subr.bf16.mxu0 0
    %252 = vmatpush2.bf16.msra.mxu0 0
    %253 = vmatprep.subr.bf16.mxu0 0
    %254 = vmatpush2.bf16.msra.mxu0 0
    %255 = vmatprep.subr.bf16.mxu0 0
    %256 = vmatpush2.bf16.msra.mxu0 0
    %257 = vmatprep.subr.bf16.mxu0 0
    %258 = vmatpush2.bf16.msra.mxu0 0
    %259 = vmatprep.subr.bf16.mxu0 0
    %260 = vmatpush2.bf16.msra.mxu0 0
    %261 = vmatprep.subr.bf16.mxu0 0
    %262 = vmatpush2.bf16.msra.mxu0 0
    %263 = vmatprep.mubr.bf16.mxu0 0
    %264 = vmatmul.mubr.bf16.gmra.mxu0 %v220
    %v265 = vpop.f32.mrf.mxu0
    %v266 = vadd.f32 %v216, %v265
    %v267 = vpop.f32.mrf.mxu0
    %v268 = vpop.f32.mrf.mxu0
    %v269 = vadd.f32 %v216, %v268
    %v270 = vpop.f32.mrf.mxu0
    %271 = vmatprep.mubr.bf16.mxu0 0
    %272 = vmatmul.mubr.bf16.gmra.mxu0 %v223
    %v273 = vpop.f32.mrf.mxu0
    %v274 = vadd.f32 %v216, %v273
    %v275 = vpop.f32.mrf.mxu0
    %v276 = vpop.f32.mrf.mxu0
    %v277 = vadd.f32 %v216, %v276
    %v278 = vpop.f32.mrf.mxu0
    %279 = vmatprep.mubr.bf16.mxu0 0
    %280 = vmatmul.mubr.bf16.gmra.mxu0 %v226
    %v281 = vpop.f32.mrf.mxu0
    %v282 = vadd.f32 %v216, %v281
    %v283 = vpop.f32.mrf.mxu0
    %v284 = vpop.f32.mrf.mxu0
    %v285 = vadd.f32 %v216, %v284
    %v286 = vpop.f32.mrf.mxu0
    %287 = vmatprep.mubr.bf16.mxu0 0
    %288 = vmatmul.mubr.bf16.gmra.mxu0 %v229
    %v289 = vpop.f32.mrf.mxu0
    %v290 = vadd.f32 %v216, %v289
    %v291 = vpop.f32.mrf.mxu0
    %v292 = vpop.f32.mrf.mxu0
    %v293 = vadd.f32 %v216, %v292
    %v294 = vpop.f32.mrf.mxu0
    %295 = vdwg.mxu0
    %v296 = vmax.f32 %v266, 0.0
    %v297 = vmax.f32 %v269, 0.0
    %v298 = vmax.f32 %v274, 0.0
    %v299 = vmax.f32 %v277, 0.0
    %v300 = vmax.f32 %v282, 0.0
    %v301 = vmax.f32 %v285, 0.0
    %v302 = vmax.f32 %v290, 0.0
    %v303 = vmax.f32 %v293, 0.0
    %v304 = vpack.c.bf16 %v297, %v296
    %v305 = vpack.c.bf16 %v299, %v298
    %v306 = vpack.c.bf16 %v301, %v300
    %v307 = vpack.c.bf16 %v303, %v302
    %308 = vmatprep.subr.bf16.mxu0 0
    %309 = vmatpush1.bf16.msra.mxu0 0
    %310 = vmatprep.subr.bf16.mxu0 0
    %311 = vmatpush1.bf16.msra.mxu0 0
    %312 = vmatprep.subr.bf16.mxu0 0
    %313 = vmatpush1.bf16.msra.mxu0 0
    %314 = vmatprep.subr.bf16.mxu0 0
    %315 = vmatpush1.bf16.msra.mxu0 0
    %316 = vmatprep.subr.bf16.mxu0 0
    %317 = vmatpush1.bf16.msra.mxu0 %v307
    %318 = vmatprep.subr.bf16.mxu0 0
    %319 = vmatpush1.bf16.msra.mxu0 %v306
    %320 = vmatprep.subr.bf16.mxu0 0
    %321 = vmatpush1.bf16.msra.mxu0 %v305
    %322 = vmatprep.subr.bf16.mxu0 0
    %323 = vmatpush1.bf16.msra.mxu0 %v304
    %324 = vmatprep.subr.bf16.mxu0 0
    %325 = vmatpush2.bf16.msra.mxu0 0
    %326 = vmatprep.subr.bf16.mxu0 0
    %327 = vmatpush2.bf16.msra.mxu0 0
    %328 = vmatprep.subr.bf16.mxu0 0
    %329 = vmatpush2.bf16.msra.mxu0 0
    %330 = vmatprep.subr.bf16.mxu0 0
    %331 = vmatpush2.bf16.msra.mxu0 0
    %332 = vmatprep.subr.bf16.mxu0 0
    %333 = vmatpush2.bf16.msra.mxu0 0
    %334 = vmatprep.subr.bf16.mxu0 0
    %335 = vmatpush2.bf16.msra.mxu0 0
    %336 = vmatprep.subr.bf16.mxu0 0
    %337 = vmatpush2.bf16.msra.mxu0 0
    %338 = vmatprep.subr.bf16.mxu0 0
    %339 = vmatpush2.bf16.msra.mxu0 0
    %340 = vmatprep.mubr.bf16.mxu0 0
    %341 = vmatmul.mubr.bf16.gmra.mxu0 %v125
    %v342 = vpop.f32.mrf.mxu0
    %v343 = vadd.f32 0.0, %v342
    %v344 = vpop.f32.mrf.mxu0
    %v345 = vpop.f32.mrf.mxu0
    %v346 = vadd.f32 0.0, %v345
    %v347 = vpop.f32.mrf.mxu0
    %348 = vmatprep.mubr.bf16.mxu0 0
    %349 = vmatmul.mubr.bf16.gmra.mxu0 %v128
    %v350 = vpop.f32.mrf.mxu0
    %v351 = vadd.f32 0.0, %v350
    %v352 = vpop.f32.mrf.mxu0
    %v353 = vpop.f32.mrf.mxu0
    %v354 = vadd.f32 0.0, %v353
    %v355 = vpop.f32.mrf.mxu0
    %356 = vmatprep.mubr.bf16.mxu0 0
    %357 = vmatmul.mubr.bf16.gmra.mxu0 %v131
    %v358 = vpop.f32.mrf.mxu0
    %v359 = vadd.f32 0.0, %v358
    %v360 = vpop.f32.mrf.mxu0
    %v361 = vpop.f32.mrf.mxu0
    %v362 = vadd.f32 0.0, %v361
    %v363 = vpop.f32.mrf.mxu0
    %364 = vmatprep.mubr.bf16.mxu0 0
    %365 = vmatmul.mubr.bf16.gmra.mxu0 %v134
    %v366 = vpop.f32.mrf.mxu0
    %v367 = vadd.f32 0.0, %v366
    %v368 = vpop.f32.mrf.mxu0
    %v369 = vpop.f32.mrf.mxu0
    %v370 = vadd.f32 0.0, %v369
    %v371 = vpop.f32.mrf.mxu0
    %372 = vdwg.mxu0
    %v373 = vpack.c.bf16 %v346, %v343
    %v374 = vpack.c.bf16 %v354, %v351
    %v375 = vpack.c.bf16 %v362, %v359
    %v376 = vpack.c.bf16 %v370, %v367
    %v377 = vld [vmem:[#allocation2] sm:$0xff]
    %v378 = vld [vmem:[#allocation2 + $0x8] sm:$0xff]
    %v379 = vld [vmem:[#allocation2 + $0x10] sm:$0xff]
    %v380 = vld [vmem:[#allocation2 + $0x18] sm:$0xff]
    %v381 = vpack.c.bf16 %v378, %v377
    %v382 = vpack.c.bf16 %v380, %v379
    %v383 = vld [vmem:[#allocation5] sm:$0x1]
    %v385 = vlaneseq
    %v386 = vshrl.u32 %v385, 7
    %v387 = vsub.s32 0, %v386
    %v388 = vrot.slane %v383, %v387
    %v391 = vsel %vm218, %v373, 0
    %v394 = vsel %vm218, %v374, 0
    %v397 = vsel %vm218, %v375, 0
    %v400 = vsel %vm218, %v376, 0
    %402 = vmatprep.subr.bf16.mxu0 0
    %403 = vmatpush1.bf16.msra.mxu0 0
    %404 = vmatprep.subr.bf16.mxu0 0
    %405 = vmatpush1.bf16.msra.mxu0 0
    %406 = vmatprep.subr.bf16.mxu0 0
    %407 = vmatpush1.bf16.msra.mxu0 0
    %408 = vmatprep.subr.bf16.mxu0 0
    %409 = vmatpush1.bf16.msra.mxu0 0
    %410 = vmatprep.subr.bf16.mxu0 0
    %411 = vmatpush1.bf16.msra.mxu0 0
    %412 = vmatprep.subr.bf16.mxu0 0
    %413 = vmatpush1.bf16.msra.mxu0 0
    %414 = vmatprep.subr.bf16.mxu0 0
    %415 = vmatpush1.bf16.msra.mxu0 %v382
    %416 = vmatprep.subr.bf16.mxu0 0
    %417 = vmatpush1.bf16.msra.mxu0 %v381
    %418 = vmatprep.subr.bf16.mxu0 0
    %419 = vmatpush2.bf16.msra.mxu0 0
    %420 = vmatprep.subr.bf16.mxu0 0
    %421 = vmatpush2.bf16.msra.mxu0 0
    %422 = vmatprep.subr.bf16.mxu0 0
    %423 = vmatpush2.bf16.msra.mxu0 0
    %424 = vmatprep.subr.bf16.mxu0 0
    %425 = vmatpush2.bf16.msra.mxu0 0
    %426 = vmatprep.subr.bf16.mxu0 0
    %427 = vmatpush2.bf16.msra.mxu0 0
    %428 = vmatprep.subr.bf16.mxu0 0
    %429 = vmatpush2.bf16.msra.mxu0 0
    %430 = vmatprep.subr.bf16.mxu0 0
    %431 = vmatpush2.bf16.msra.mxu0 0
    %432 = vmatprep.subr.bf16.mxu0 0
    %433 = vmatpush2.bf16.msra.mxu0 0
    %434 = vmatprep.mubr.bf16.mxu0 0
    %435 = vmatmul.mubr.bf16.gmra.mxu0 %v391
    %v436 = vpop.f32.mrf.mxu0
    %v437 = vadd.f32 %v388, %v436
    %v438 = vpop.f32.mrf.mxu0
    %v439 = vpop.f32.mrf.mxu0
    %v440 = vadd.f32 %v388, %v439
    %v441 = vpop.f32.mrf.mxu0
    %442 = vmatprep.mubr.bf16.mxu0 0
    %443 = vmatmul.mubr.bf16.gmra.mxu0 %v394
    %v444 = vpop.f32.mrf.mxu0
    %v445 = vadd.f32 %v388, %v444
    %v446 = vpop.f32.mrf.mxu0
    %v447 = vpop.f32.mrf.mxu0
    %v448 = vadd.f32 %v388, %v447
    %v449 = vpop.f32.mrf.mxu0
    %450 = vmatprep.mubr.bf16.mxu0 0
    %451 = vmatmul.mubr.bf16.gmra.mxu0 %v397
    %v452 = vpop.f32.mrf.mxu0
    %v453 = vadd.f32 %v388, %v452
    %v454 = vpop.f32.mrf.mxu0
    %v455 = vpop.f32.mrf.mxu0
    %v456 = vadd.f32 %v388, %v455
    %v457 = vpop.f32.mrf.mxu0
    %458 = vmatprep.mubr.bf16.mxu0 0
    %459 = vmatmul.mubr.bf16.gmra.mxu0 %v400
    %v460 = vpop.f32.mrf.mxu0
    %v461 = vadd.f32 %v388, %v460
    %v462 = vpop.f32.mrf.mxu0
    %v463 = vpop.f32.mrf.mxu0
    %v464 = vadd.f32 %v388, %v463
    %v465 = vpop.f32.mrf.mxu0
    %466 = vdwg.mxu0
    %v467 = vmax.f32 %v437, 0.0
    %v468 = vmax.f32 %v440, 0.0
    %v469 = vmax.f32 %v445, 0.0
    %v470 = vmax.f32 %v448, 0.0
    %v471 = vmax.f32 %v453, 0.0
    %v472 = vmax.f32 %v456, 0.0
    %v473 = vmax.f32 %v461, 0.0
    %v474 = vmax.f32 %v464, 0.0
    %v475 = vpack.c.bf16 %v468, %v467
    %v476 = vpack.c.bf16 %v470, %v469
    %v477 = vpack.c.bf16 %v472, %v471
    %v478 = vpack.c.bf16 %v474, %v473
    %479 = vmatprep.subr.bf16.mxu0 0
    %480 = vmatpush1.bf16.msra.mxu0 0
    %481 = vmatprep.subr.bf16.mxu0 0
    %482 = vmatpush1.bf16.msra.mxu0 0
    %483 = vmatprep.subr.bf16.mxu0 0
    %484 = vmatpush1.bf16.msra.mxu0 0
    %485 = vmatprep.subr.bf16.mxu0 0
    %486 = vmatpush1.bf16.msra.mxu0 0
    %487 = vmatprep.subr.bf16.mxu0 0
    %488 = vmatpush1.bf16.msra.mxu0 %v478
    %489 = vmatprep.subr.bf16.mxu0 0
    %490 = vmatpush1.bf16.msra.mxu0 %v477
    %491 = vmatprep.subr.bf16.mxu0 0
    %492 = vmatpush1.bf16.msra.mxu0 %v476
    %493 = vmatprep.subr.bf16.mxu0 0
    %494 = vmatpush1.bf16.msra.mxu0 %v475
    %495 = vmatprep.subr.bf16.mxu0 0
    %496 = vmatpush2.bf16.msra.mxu0 0
    %497 = vmatprep.subr.bf16.mxu0 0
    %498 = vmatpush2.bf16.msra.mxu0 0
    %499 = vmatprep.subr.bf16.mxu0 0
    %500 = vmatpush2.bf16.msra.mxu0 0
    %501 = vmatprep.subr.bf16.mxu0 0
    %502 = vmatpush2.bf16.msra.mxu0 0
    %503 = vmatprep.subr.bf16.mxu0 0
    %504 = vmatpush2.bf16.msra.mxu0 0
    %505 = vmatprep.subr.bf16.mxu0 0
    %506 = vmatpush2.bf16.msra.mxu0 0
    %507 = vmatprep.subr.bf16.mxu0 0
    %508 = vmatpush2.bf16.msra.mxu0 0
    %509 = vmatprep.subr.bf16.mxu0 0
    %510 = vmatpush2.bf16.msra.mxu0 0
    %511 = vmatprep.mubr.bf16.mxu0 0
    %512 = vmatmul.mubr.bf16.gmra.mxu0 %v125
    %v513 = vpop.f32.mrf.mxu0
    %v514 = vadd.f32 0.0, %v513
    %v515 = vpop.f32.mrf.mxu0
    %v516 = vpop.f32.mrf.mxu0
    %v517 = vadd.f32 0.0, %v516
    %v518 = vpop.f32.mrf.mxu0
    %519 = vmatprep.mubr.bf16.mxu0 0
    %520 = vmatmul.mubr.bf16.gmra.mxu0 %v128
    %v521 = vpop.f32.mrf.mxu0
    %v522 = vadd.f32 0.0, %v521
    %v523 = vpop.f32.mrf.mxu0
    %v524 = vpop.f32.mrf.mxu0
    %v525 = vadd.f32 0.0, %v524
    %v526 = vpop.f32.mrf.mxu0
    %527 = vmatprep.mubr.bf16.mxu0 0
    %528 = vmatmul.mubr.bf16.gmra.mxu0 %v131
    %v529 = vpop.f32.mrf.mxu0
    %v530 = vadd.f32 0.0, %v529
    %v531 = vpop.f32.mrf.mxu0
    %v532 = vpop.f32.mrf.mxu0
    %v533 = vadd.f32 0.0, %v532
    %v534 = vpop.f32.mrf.mxu0
    %535 = vmatprep.mubr.bf16.mxu0 0
    %536 = vmatmul.mubr.bf16.gmra.mxu0 %v134
    %v537 = vpop.f32.mrf.mxu0
    %v538 = vadd.f32 0.0, %v537
    %v539 = vpop.f32.mrf.mxu0
    %v540 = vpop.f32.mrf.mxu0
    %v541 = vadd.f32 0.0, %v540
    %v542 = vpop.f32.mrf.mxu0
    %543 = vdwg.mxu0
    %v544 = vpack.c.bf16 %v517, %v514
    %v545 = vpack.c.bf16 %v525, %v522
    %v546 = vpack.c.bf16 %v533, %v530
    %v547 = vpack.c.bf16 %v541, %v538
    %v548 = vld [vmem:[%s6] sm:$0xff]
    %v549 = vld [vmem:[%s6 + $0x8] sm:$0xff]
    %v550 = vld [vmem:[%s6 + $0x10] sm:$0xff]
    %v551 = vld [vmem:[%s6 + $0x18] sm:$0xff]
    %v552 = vld [vmem:[%s6 + $0x20] sm:$0xff]
    %v553 = vld [vmem:[%s6 + $0x28] sm:$0xff]
    %v554 = vld [vmem:[%s6 + $0x30] sm:$0xff]
    %v555 = vld [vmem:[%s6 + $0x38] sm:$0xff]
    %v556 = vpack.c.bf16 %v549, %v548
    %v557 = vpack.c.bf16 %v551, %v550
    %v558 = vpack.c.bf16 %v553, %v552
    %v559 = vpack.c.bf16 %v555, %v554
    %v560 = vld [vmem:[%s7] sm:$0x1]
    %v562 = vlaneseq
    %v563 = vshrl.u32 %v562, 7
    %v564 = vsub.s32 0, %v563
    %v565 = vrot.slane %v560, %v564
    %v568 = vsel %vm123, %v544, 0
    %v571 = vsel %vm123, %v545, 0
    %v574 = vsel %vm123, %v546, 0
    %v577 = vsel %vm123, %v547, 0
    %579 = vmatprep.subr.bf16.mxu0 0
    %580 = vmatpush1.bf16.msra.mxu0 0
    %581 = vmatprep.subr.bf16.mxu0 0
    %582 = vmatpush1.bf16.msra.mxu0 0
    %583 = vmatprep.subr.bf16.mxu0 0
    %584 = vmatpush1.bf16.msra.mxu0 0
    %585 = vmatprep.subr.bf16.mxu0 0
    %586 = vmatpush1.bf16.msra.mxu0 0
    %587 = vmatprep.subr.bf16.mxu0 0
    %588 = vmatpush1.bf16.msra.mxu0 %v559
    %589 = vmatprep.subr.bf16.mxu0 0
    %590 = vmatpush1.bf16.msra.mxu0 %v558
    %591 = vmatprep.subr.bf16.mxu0 0
    %592 = vmatpush1.bf16.msra.mxu0 %v557
    %593 = vmatprep.subr.bf16.mxu0 0
    %594 = vmatpush1.bf16.msra.mxu0 %v556
    %595 = vmatprep.subr.bf16.mxu0 0
    %596 = vmatpush2.bf16.msra.mxu0 0
    %597 = vmatprep.subr.bf16.mxu0 0
    %598 = vmatpush2.bf16.msra.mxu0 0
    %599 = vmatprep.subr.bf16.mxu0 0
    %600 = vmatpush2.bf16.msra.mxu0 0
    %601 = vmatprep.subr.bf16.mxu0 0
    %602 = vmatpush2.bf16.msra.mxu0 0
    %603 = vmatprep.subr.bf16.mxu0 0
    %604 = vmatpush2.bf16.msra.mxu0 0
    %605 = vmatprep.subr.bf16.mxu0 0
    %606 = vmatpush2.bf16.msra.mxu0 0
    %607 = vmatprep.subr.bf16.mxu0 0
    %608 = vmatpush2.bf16.msra.mxu0 0
    %609 = vmatprep.subr.bf16.mxu0 0
    %610 = vmatpush2.bf16.msra.mxu0 0
    %611 = vmatprep.mubr.bf16.mxu0 0
    %612 = vmatmul.mubr.bf16.gmra.mxu0 %v568
    %v613 = vpop.f32.mrf.mxu0
    %v614 = vadd.f32 %v565, %v613
    %v615 = vpop.f32.mrf.mxu0
    %v616 = vpop.f32.mrf.mxu0
    %v617 = vadd.f32 %v565, %v616
    %v618 = vpop.f32.mrf.mxu0
    %619 = vmatprep.mubr.bf16.mxu0 0
    %620 = vmatmul.mubr.bf16.gmra.mxu0 %v571
    %v621 = vpop.f32.mrf.mxu0
    %v622 = vadd.f32 %v565, %v621
    %v623 = vpop.f32.mrf.mxu0
    %v624 = vpop.f32.mrf.mxu0
    %v625 = vadd.f32 %v565, %v624
    %v626 = vpop.f32.mrf.mxu0
    %627 = vmatprep.mubr.bf16.mxu0 0
    %628 = vmatmul.mubr.bf16.gmra.mxu0 %v574
    %v629 = vpop.f32.mrf.mxu0
    %v630 = vadd.f32 %v565, %v629
    %v631 = vpop.f32.mrf.mxu0
    %v632 = vpop.f32.mrf.mxu0
    %v633 = vadd.f32 %v565, %v632
    %v634 = vpop.f32.mrf.mxu0
    %635 = vmatprep.mubr.bf16.mxu0 0
    %636 = vmatmul.mubr.bf16.gmra.mxu0 %v577
    %v637 = vpop.f32.mrf.mxu0
    %v638 = vadd.f32 %v565, %v637
    %v639 = vpop.f32.mrf.mxu0
    %v640 = vpop.f32.mrf.mxu0
    %v641 = vadd.f32 %v565, %v640
    %v642 = vpop.f32.mrf.mxu0
    %643 = vdwg.mxu0
    %v644 = vmax.f32 %v614, 0.0
    %v645 = vmax.f32 %v617, 0.0
    %v646 = vmax.f32 %v622, 0.0
    %v647 = vmax.f32 %v625, 0.0
    %v648 = vmax.f32 %v630, 0.0
    %v649 = vmax.f32 %v633, 0.0
    %v650 = vmax.f32 %v638, 0.0
    %v651 = vmax.f32 %v641, 0.0
    %v652 = vld [vmem:[%s8] sm:$0xff]
    %v653 = vld [vmem:[%s8 + $0x8] sm:$0xff]
    %v654 = vld [vmem:[%s8 + $0x10] sm:$0xff]
    %v655 = vld [vmem:[%s8 + $0x18] sm:$0xff]
    %v656 = vld [vmem:[%s8 + $0x20] sm:$0xff]
    %v657 = vld [vmem:[%s8 + $0x28] sm:$0xff]
    %v658 = vld [vmem:[%s8 + $0x30] sm:$0xff]
    %v659 = vld [vmem:[%s8 + $0x38] sm:$0xff]
    %v660 = vsub.f32 %v652, 1.0
    %v661 = vsub.f32 %v653, 1.0
    %v662 = vsub.f32 %v654, 1.0
    %v663 = vsub.f32 %v655, 1.0
    %v664 = vsub.f32 %v656, 1.0
    %v665 = vsub.f32 %v657, 1.0
    %v666 = vsub.f32 %v658, 1.0
    %v667 = vsub.f32 %v659, 1.0
    %v668 = vmul.f32 %v660, 1e+30
    %v669 = vmul.f32 %v661, 1e+30
    %v670 = vmul.f32 %v662, 1e+30
    %v671 = vmul.f32 %v663, 1e+30
    %v672 = vmul.f32 %v664, 1e+30
    %v673 = vmul.f32 %v665, 1e+30
    %v674 = vmul.f32 %v666, 1e+30
    %v675 = vmul.f32 %v667, 1e+30
    %677 = vset.pattern.permute.xlu0 0
    %678 = vperm.xlu0 %677, %v668
    %v679 = vpop.permute.xlu0 %678
    %682 = vset.pattern.permute.xlu0 0
    %683 = vperm.xlu0 %682, %v669
    %v684 = vpop.permute.xlu0 %683
    %687 = vset.pattern.permute.xlu0 0
    %688 = vperm.xlu0 %687, %v670
    %v689 = vpop.permute.xlu0 %688
    %692 = vset.pattern.permute.xlu0 0
    %693 = vperm.xlu0 %692, %v671
    %v694 = vpop.permute.xlu0 %693
    %697 = vset.pattern.permute.xlu0 0
    %698 = vperm.xlu0 %697, %v672
    %v699 = vpop.permute.xlu0 %698
    %702 = vset.pattern.permute.xlu0 0
    %703 = vperm.xlu0 %702, %v673
    %v704 = vpop.permute.xlu0 %703
    %707 = vset.pattern.permute.xlu0 0
    %708 = vperm.xlu0 %707, %v674
    %v709 = vpop.permute.xlu0 %708
    %712 = vset.pattern.permute.xlu0 0
    %713 = vperm.xlu0 %712, %v675
    %v714 = vpop.permute.xlu0 %713
    %v716 = vadd.f32 %v644, %v679
    %v717 = vadd.f32 %v645, %v684
    %v718 = vadd.f32 %v646, %v689
    %v719 = vadd.f32 %v647, %v694
    %v720 = vadd.f32 %v648, %v699
    %v721 = vadd.f32 %v649, %v704
    %v722 = vadd.f32 %v650, %v709
    %v723 = vadd.f32 %v651, %v714
    %v724 = vmax.f32 %v716, %v720
    %v725 = vmax.f32 %v717, %v721
    %v726 = vmax.f32 %v718, %v722
    %v727 = vmax.f32 %v719, %v723
    %v728 = vmax.f32 %v724, %v725
    %v729 = vmax.f32 %v726, %v727
    %v730 = vmax.f32 %v728, %v729
    %v731 = vrot.slane %v730, 4
    %v732 = vmax.f32 %v730, %v731
    %v733 = vrot.slane %v732, 2
    %v734 = vmax.f32 %v732, %v733
    %v735 = vrot.slane %v734, 1
    %v736 = vmax.f32 %v734, %v735
    %737 = vset.pattern.permute.xlu0 1
    %738 = vperm.xlu0 %737, %v668
    %v739 = vpop.permute.xlu0 %738
    %741 = vset.pattern.permute.xlu0 1
    %742 = vperm.xlu0 %741, %v669
    %v743 = vpop.permute.xlu0 %742
    %745 = vset.pattern.permute.xlu0 1
    %746 = vperm.xlu0 %745, %v670
    %v747 = vpop.permute.xlu0 %746
    %749 = vset.pattern.permute.xlu0 1
    %750 = vperm.xlu0 %749, %v671
    %v751 = vpop.permute.xlu0 %750
    %753 = vset.pattern.permute.xlu0 1
    %754 = vperm.xlu0 %753, %v672
    %v755 = vpop.permute.xlu0 %754
    %757 = vset.pattern.permute.xlu0 1
    %758 = vperm.xlu0 %757, %v673
    %v759 = vpop.permute.xlu0 %758
    %761 = vset.pattern.permute.xlu0 1
    %762 = vperm.xlu0 %761, %v674
    %v763 = vpop.permute.xlu0 %762
    %765 = vset.pattern.permute.xlu0 1
    %766 = vperm.xlu0 %765, %v675
    %v767 = vpop.permute.xlu0 %766
    %v769 = vadd.f32 %v644, %v739
    %v770 = vadd.f32 %v645, %v743
    %v771 = vadd.f32 %v646, %v747
    %v772 = vadd.f32 %v647, %v751
    %v773 = vadd.f32 %v648, %v755
    %v774 = vadd.f32 %v649, %v759
    %v775 = vadd.f32 %v650, %v763
    %v776 = vadd.f32 %v651, %v767
    %v777 = vmax.f32 %v769, %v773
    %v778 = vmax.f32 %v770, %v774
    %v779 = vmax.f32 %v771, %v775
    %v780 = vmax.f32 %v772, %v776
    %v781 = vmax.f32 %v777, %v778
    %v782 = vmax.f32 %v779, %v780
    %v783 = vmax.f32 %v781, %v782
    %v784 = vrot.slane %v783, 4
    %v785 = vmax.f32 %v783, %v784
    %v786 = vrot.slane %v785, 2
    %v787 = vmax.f32 %v785, %v786
    %v788 = vrot.slane %v787, 1
    %v789 = vmax.f32 %v787, %v788
    %vm790 = vcmask 1040384
    %v791 = vsel %vm790, %v736, %v789
    %v792 = vpack.c.bf16 %v791, %v791
    %v793 = vld [vmem:[#allocation7] sm:$0xff]
    %v794 = vld [vmem:[#allocation7 + $0x8] sm:$0xff]
    %v795 = vld [vmem:[#allocation7 + $0x10] sm:$0xff]
    %v796 = vld [vmem:[#allocation7 + $0x18] sm:$0xff]
    %v797 = vld [vmem:[#allocation7 + $0x20] sm:$0xff]
    %v798 = vld [vmem:[#allocation7 + $0x28] sm:$0xff]
    %v799 = vld [vmem:[#allocation7 + $0x30] sm:$0xff]
    %v800 = vld [vmem:[#allocation7 + $0x38] sm:$0xff]
    %v801 = vld [vmem:[#allocation7 + $0x40] sm:$0xff]
    %v802 = vld [vmem:[#allocation7 + $0x48] sm:$0xff]
    %v803 = vld [vmem:[#allocation7 + $0x50] sm:$0xff]
    %v804 = vld [vmem:[#allocation7 + $0x58] sm:$0xff]
    %v805 = vld [vmem:[#allocation7 + $0x60] sm:$0xff]
    %v806 = vld [vmem:[#allocation7 + $0x68] sm:$0xff]
    %v807 = vld [vmem:[#allocation7 + $0x70] sm:$0xff]
    %v808 = vld [vmem:[#allocation7 + $0x78] sm:$0xff]
    %v809 = vld [vmem:[#allocation7 + $0x80] sm:$0xff]
    %v810 = vld [vmem:[#allocation7 + $0x88] sm:$0xff]
    %v811 = vld [vmem:[#allocation7 + $0x90] sm:$0xff]
    %v812 = vld [vmem:[#allocation7 + $0x98] sm:$0xff]
    %v813 = vld [vmem:[#allocation7 + $0xa0] sm:$0xff]
    %v814 = vld [vmem:[#allocation7 + $0xa8] sm:$0xff]
    %v815 = vld [vmem:[#allocation7 + $0xb0] sm:$0xff]
    %v816 = vld [vmem:[#allocation7 + $0xb8] sm:$0xff]
    %v817 = vld [vmem:[#allocation7 + $0xc0] sm:$0xff]
    %v818 = vld [vmem:[#allocation7 + $0xc8] sm:$0xff]
    %v819 = vld [vmem:[#allocation7 + $0xd0] sm:$0xff]
    %v820 = vld [vmem:[#allocation7 + $0xd8] sm:$0xff]
    %v821 = vld [vmem:[#allocation7 + $0xe0] sm:$0xff]
    %v822 = vld [vmem:[#allocation7 + $0xe8] sm:$0xff]
    %v823 = vld [vmem:[#allocation7 + $0xf0] sm:$0xff]
    %v824 = vld [vmem:[#allocation7 + $0xf8] sm:$0xff]
    %v825 = vld [vmem:[#allocation7 + $0x100] sm:$0xff]
    %v826 = vld [vmem:[#allocation7 + $0x108] sm:$0xff]
    %v827 = vld [vmem:[#allocation7 + $0x110] sm:$0xff]
    %v828 = vld [vmem:[#allocation7 + $0x118] sm:$0xff]
    %v829 = vld [vmem:[#allocation7 + $0x120] sm:$0xff]
    %v830 = vld [vmem:[#allocation7 + $0x128] sm:$0xff]
    %v831 = vld [vmem:[#allocation7 + $0x130] sm:$0xff]
    %v832 = vld [vmem:[#allocation7 + $0x138] sm:$0xff]
    %v833 = vld [vmem:[#allocation7 + $0x140] sm:$0xff]
    %v834 = vld [vmem:[#allocation7 + $0x148] sm:$0xff]
    %v835 = vld [vmem:[#allocation7 + $0x150] sm:$0xff]
    %v836 = vld [vmem:[#allocation7 + $0x158] sm:$0xff]
    %v837 = vld [vmem:[#allocation7 + $0x160] sm:$0xff]
    %v838 = vld [vmem:[#allocation7 + $0x168] sm:$0xff]
    %v839 = vld [vmem:[#allocation7 + $0x170] sm:$0xff]
    %v840 = vld [vmem:[#allocation7 + $0x178] sm:$0xff]
    %v841 = vld [vmem:[#allocation7 + $0x180] sm:$0xff]
    %v842 = vld [vmem:[#allocation7 + $0x188] sm:$0xff]
    %v843 = vld [vmem:[#allocation7 + $0x190] sm:$0xff]
    %v844 = vld [vmem:[#allocation7 + $0x198] sm:$0xff]
    %v845 = vld [vmem:[#allocation7 + $0x1a0] sm:$0xff]
    %v846 = vld [vmem:[#allocation7 + $0x1a8] sm:$0xff]
    %v847 = vld [vmem:[#allocation7 + $0x1b0] sm:$0xff]
    %v848 = vld [vmem:[#allocation7 + $0x1b8] sm:$0xff]
    %v849 = vld [vmem:[#allocation7 + $0x1c0] sm:$0xff]
    %v850 = vld [vmem:[#allocation7 + $0x1c8] sm:$0xff]
    %v851 = vld [vmem:[#allocation7 + $0x1d0] sm:$0xff]
    %v852 = vld [vmem:[#allocation7 + $0x1d8] sm:$0xff]
    %v853 = vld [vmem:[#allocation7 + $0x1e0] sm:$0xff]
    %v854 = vld [vmem:[#allocation7 + $0x1e8] sm:$0xff]
    %v855 = vld [vmem:[#allocation7 + $0x1f0] sm:$0xff]
    %v856 = vld [vmem:[#allocation7 + $0x1f8] sm:$0xff]
    %v857 = vld [vmem:[#allocation7 + $0x200] sm:$0xff]
    %v858 = vld [vmem:[#allocation7 + $0x208] sm:$0xff]
    %v859 = vld [vmem:[#allocation7 + $0x210] sm:$0xff]
    %v860 = vld [vmem:[#allocation7 + $0x218] sm:$0xff]
    %v861 = vld [vmem:[#allocation7 + $0x220] sm:$0xff]
    %v862 = vld [vmem:[#allocation7 + $0x228] sm:$0xff]
    %v863 = vld [vmem:[#allocation7 + $0x230] sm:$0xff]
    %v864 = vld [vmem:[#allocation7 + $0x238] sm:$0xff]
    %v865 = vld [vmem:[#allocation7 + $0x240] sm:$0xff]
    %v866 = vld [vmem:[#allocation7 + $0x248] sm:$0xff]
    %v867 = vld [vmem:[#allocation7 + $0x250] sm:$0xff]
    %v868 = vld [vmem:[#allocation7 + $0x258] sm:$0xff]
    %v869 = vld [vmem:[#allocation7 + $0x260] sm:$0xff]
    %v870 = vld [vmem:[#allocation7 + $0x268] sm:$0xff]
    %v871 = vld [vmem:[#allocation7 + $0x270] sm:$0xff]
    %v872 = vld [vmem:[#allocation7 + $0x278] sm:$0xff]
    %v873 = vld [vmem:[#allocation7 + $0x280] sm:$0xff]
    %v874 = vld [vmem:[#allocation7 + $0x288] sm:$0xff]
    %v875 = vld [vmem:[#allocation7 + $0x290] sm:$0xff]
    %v876 = vld [vmem:[#allocation7 + $0x298] sm:$0xff]
    %v877 = vld [vmem:[#allocation7 + $0x2a0] sm:$0xff]
    %v878 = vld [vmem:[#allocation7 + $0x2a8] sm:$0xff]
    %v879 = vld [vmem:[#allocation7 + $0x2b0] sm:$0xff]
    %v880 = vld [vmem:[#allocation7 + $0x2b8] sm:$0xff]
    %v881 = vld [vmem:[#allocation7 + $0x2c0] sm:$0xff]
    %v882 = vld [vmem:[#allocation7 + $0x2c8] sm:$0xff]
    %v883 = vld [vmem:[#allocation7 + $0x2d0] sm:$0xff]
    %v884 = vld [vmem:[#allocation7 + $0x2d8] sm:$0xff]
    %v885 = vld [vmem:[#allocation7 + $0x2e0] sm:$0xff]
    %v886 = vld [vmem:[#allocation7 + $0x2e8] sm:$0xff]
    %v887 = vld [vmem:[#allocation7 + $0x2f0] sm:$0xff]
    %v888 = vld [vmem:[#allocation7 + $0x2f8] sm:$0xff]
    %v889 = vld [vmem:[#allocation7 + $0x300] sm:$0xff]
    %v890 = vld [vmem:[#allocation7 + $0x308] sm:$0xff]
    %v891 = vld [vmem:[#allocation7 + $0x310] sm:$0xff]
    %v892 = vld [vmem:[#allocation7 + $0x318] sm:$0xff]
    %v893 = vld [vmem:[#allocation7 + $0x320] sm:$0xff]
    %v894 = vld [vmem:[#allocation7 + $0x328] sm:$0xff]
    %v895 = vld [vmem:[#allocation7 + $0x330] sm:$0xff]
    %v896 = vld [vmem:[#allocation7 + $0x338] sm:$0xff]
    %v897 = vld [vmem:[#allocation7 + $0x340] sm:$0xff]
    %v898 = vld [vmem:[#allocation7 + $0x348] sm:$0xff]
    %v899 = vld [vmem:[#allocation7 + $0x350] sm:$0xff]
    %v900 = vld [vmem:[#allocation7 + $0x358] sm:$0xff]
    %v901 = vld [vmem:[#allocation7 + $0x360] sm:$0xff]
    %v902 = vld [vmem:[#allocation7 + $0x368] sm:$0xff]
    %v903 = vld [vmem:[#allocation7 + $0x370] sm:$0xff]
    %v904 = vld [vmem:[#allocation7 + $0x378] sm:$0xff]
    %v905 = vld [vmem:[#allocation7 + $0x380] sm:$0xff]
    %v906 = vld [vmem:[#allocation7 + $0x388] sm:$0xff]
    %v907 = vld [vmem:[#allocation7 + $0x390] sm:$0xff]
    %v908 = vld [vmem:[#allocation7 + $0x398] sm:$0xff]
    %v909 = vld [vmem:[#allocation7 + $0x3a0] sm:$0xff]
    %v910 = vld [vmem:[#allocation7 + $0x3a8] sm:$0xff]
    %v911 = vld [vmem:[#allocation7 + $0x3b0] sm:$0xff]
    %v912 = vld [vmem:[#allocation7 + $0x3b8] sm:$0xff]
    %v913 = vld [vmem:[#allocation7 + $0x3c0] sm:$0xff]
    %v914 = vld [vmem:[#allocation7 + $0x3c8] sm:$0xff]
    %v915 = vld [vmem:[#allocation7 + $0x3d0] sm:$0xff]
    %v916 = vld [vmem:[#allocation7 + $0x3d8] sm:$0xff]
    %v917 = vld [vmem:[#allocation7 + $0x3e0] sm:$0xff]
    %v918 = vld [vmem:[#allocation7 + $0x3e8] sm:$0xff]
    %v919 = vld [vmem:[#allocation7 + $0x3f0] sm:$0xff]
    %v920 = vld [vmem:[#allocation7 + $0x3f8] sm:$0xff]
    %v921 = vpack.c.bf16 %v801, %v793
    %v922 = vpack.c.bf16 %v802, %v794
    %v923 = vpack.c.bf16 %v803, %v795
    %v924 = vpack.c.bf16 %v804, %v796
    %v925 = vpack.c.bf16 %v805, %v797
    %v926 = vpack.c.bf16 %v806, %v798
    %v927 = vpack.c.bf16 %v807, %v799
    %v928 = vpack.c.bf16 %v808, %v800
    %v929 = vpack.c.bf16 %v817, %v809
    %v930 = vpack.c.bf16 %v818, %v810
    %v931 = vpack.c.bf16 %v819, %v811
    %v932 = vpack.c.bf16 %v820, %v812
    %v933 = vpack.c.bf16 %v821, %v813
    %v934 = vpack.c.bf16 %v822, %v814
    %v935 = vpack.c.bf16 %v823, %v815
    %v936 = vpack.c.bf16 %v824, %v816
    %v937 = vpack.c.bf16 %v833, %v825
    %v938 = vpack.c.bf16 %v834, %v826
    %v939 = vpack.c.bf16 %v835, %v827
    %v940 = vpack.c.bf16 %v836, %v828
    %v941 = vpack.c.bf16 %v837, %v829
    %v942 = vpack.c.bf16 %v838, %v830
    %v943 = vpack.c.bf16 %v839, %v831
    %v944 = vpack.c.bf16 %v840, %v832
    %v945 = vpack.c.bf16 %v849, %v841
    %v946 = vpack.c.bf16 %v850, %v842
    %v947 = vpack.c.bf16 %v851, %v843
    %v948 = vpack.c.bf16 %v852, %v844
    %v949 = vpack.c.bf16 %v853, %v845
    %v950 = vpack.c.bf16 %v854, %v846
    %v951 = vpack.c.bf16 %v855, %v847
    %v952 = vpack.c.bf16 %v856, %v848
    %v953 = vpack.c.bf16 %v865, %v857
    %v954 = vpack.c.bf16 %v866, %v858
    %v955 = vpack.c.bf16 %v867, %v859
    %v956 = vpack.c.bf16 %v868, %v860
    %v957 = vpack.c.bf16 %v869, %v861
    %v958 = vpack.c.bf16 %v870, %v862
    %v959 = vpack.c.bf16 %v871, %v863
    %v960 = vpack.c.bf16 %v872, %v864
    %v961 = vpack.c.bf16 %v881, %v873
    %v962 = vpack.c.bf16 %v882, %v874
    %v963 = vpack.c.bf16 %v883, %v875
    %v964 = vpack.c.bf16 %v884, %v876
    %v965 = vpack.c.bf16 %v885, %v877
    %v966 = vpack.c.bf16 %v886, %v878
    %v967 = vpack.c.bf16 %v887, %v879
    %v968 = vpack.c.bf16 %v888, %v880
    %v969 = vpack.c.bf16 %v897, %v889
    %v970 = vpack.c.bf16 %v898, %v890
    %v971 = vpack.c.bf16 %v899, %v891
    %v972 = vpack.c.bf16 %v900, %v892
    %v973 = vpack.c.bf16 %v901, %v893
    %v974 = vpack.c.bf16 %v902, %v894
    %v975 = vpack.c.bf16 %v903, %v895
    %v976 = vpack.c.bf16 %v904, %v896
    %v977 = vpack.c.bf16 %v913, %v905
    %v978 = vpack.c.bf16 %v914, %v906
    %v979 = vpack.c.bf16 %v915, %v907
    %v980 = vpack.c.bf16 %v916, %v908
    %v981 = vpack.c.bf16 %v917, %v909
    %v982 = vpack.c.bf16 %v918, %v910
    %v983 = vpack.c.bf16 %v919, %v911
    %v984 = vpack.c.bf16 %v920, %v912
    %v985 = vld [vmem:[%s10] sm:$0xff]
    %v987 = vlaneseq
    %v988 = vshrl.u32 %v987, 7
    %v989 = vsub.s32 0, %v988
    %v990 = vrot.slane %v985, %v989
    %v991 = vlaneseq
    %v992 = vshrl.u32 %v991, 7
    %v993 = vsub.s32 1, %v992
    %v994 = vrot.slane %v985, %v993
    %v995 = vlaneseq
    %v996 = vshrl.u32 %v995, 7
    %v997 = vsub.s32 2, %v996
    %v998 = vrot.slane %v985, %v997
    %v999 = vlaneseq
    %v1000 = vshrl.u32 %v999, 7
    %v1001 = vsub.s32 3, %v1000
    %v1002 = vrot.slane %v985, %v1001
    %v1003 = vlaneseq
    %v1004 = vshrl.u32 %v1003, 7
    %v1005 = vsub.s32 4, %v1004
    %v1006 = vrot.slane %v985, %v1005
    %v1007 = vlaneseq
    %v1008 = vshrl.u32 %v1007, 7
    %v1009 = vsub.s32 5, %v1008
    %v1010 = vrot.slane %v985, %v1009
    %v1011 = vlaneseq
    %v1012 = vshrl.u32 %v1011, 7
    %v1013 = vsub.s32 6, %v1012
    %v1014 = vrot.slane %v985, %v1013
    %v1015 = vlaneseq
    %v1016 = vshrl.u32 %v1015, 7
    %v1017 = vsub.s32 7, %v1016
    %v1018 = vrot.slane %v985, %v1017
    %1027 = vmatprep.subr.bf16.mxu0 %v978
    %1028 = vmatpush1.bf16.msra.mxu0 %v977
    %1029 = vmatprep.subr.bf16.mxu0 %v970
    %1030 = vmatpush1.bf16.msra.mxu0 %v969
    %1031 = vmatprep.subr.bf16.mxu0 %v962
    %1032 = vmatpush1.bf16.msra.mxu0 %v961
    %1033 = vmatprep.subr.bf16.mxu0 %v954
    %1034 = vmatpush1.bf16.msra.mxu0 %v953
    %1035 = vmatprep.subr.bf16.mxu0 %v946
    %1036 = vmatpush1.bf16.msra.mxu0 %v945
    %1037 = vmatprep.subr.bf16.mxu0 %v938
    %1038 = vmatpush1.bf16.msra.mxu0 %v937
    %1039 = vmatprep.subr.bf16.mxu0 %v930
    %1040 = vmatpush1.bf16.msra.mxu0 %v929
    %1041 = vmatprep.subr.bf16.mxu0 %v922
    %1042 = vmatpush1.bf16.msra.mxu0 %v921
    %1043 = vmatprep.subr.bf16.mxu0 0
    %1044 = vmatpush2.bf16.msra.mxu0 0
    %1045 = vmatprep.subr.bf16.mxu0 0
    %1046 = vmatpush2.bf16.msra.mxu0 0
    %1047 = vmatprep.subr.bf16.mxu0 0
    %1048 = vmatpush2.bf16.msra.mxu0 0
    %1049 = vmatprep.subr.bf16.mxu0 0
    %1050 = vmatpush2.bf16.msra.mxu0 0
    %1051 = vmatprep.subr.bf16.mxu0 0
    %1052 = vmatpush2.bf16.msra.mxu0 0
    %1053 = vmatprep.subr.bf16.mxu0 0
    %1054 = vmatpush2.bf16.msra.mxu0 0
    %1055 = vmatprep.subr.bf16.mxu0 0
    %1056 = vmatpush2.bf16.msra.mxu0 0
    %1057 = vmatprep.subr.bf16.mxu0 0
    %1058 = vmatpush2.bf16.msra.mxu0 0
    %1059 = vmatprep.mubr.bf16.mxu0 0
    %1060 = vmatmul.mubr.bf16.gmra.mxu0 %v792
    %v1061 = vpop.f32.mrf.mxu0
    %v1062 = vadd.f32 %v990, %v1061
    %v1063 = vpop.f32.mrf.mxu0
    %v1064 = vadd.f32 %v994, %v1063
    %v1065 = vpop.f32.mrf.mxu0
    %v1066 = vpop.f32.mrf.mxu0
    %1067 = vdwg.mxu0
    %1068 = vmatprep.subr.bf16.mxu0 %v980
    %1069 = vmatpush1.bf16.msra.mxu0 %v979
    %1070 = vmatprep.subr.bf16.mxu0 %v972
    %1071 = vmatpush1.bf16.msra.mxu0 %v971
    %1072 = vmatprep.subr.bf16.mxu0 %v964
    %1073 = vmatpush1.bf16.msra.mxu0 %v963
    %1074 = vmatprep.subr.bf16.mxu0 %v956
    %1075 = vmatpush1.bf16.msra.mxu0 %v955
    %1076 = vmatprep.subr.bf16.mxu0 %v948
    %1077 = vmatpush1.bf16.msra.mxu0 %v947
    %1078 = vmatprep.subr.bf16.mxu0 %v940
    %1079 = vmatpush1.bf16.msra.mxu0 %v939
    %1080 = vmatprep.subr.bf16.mxu0 %v932
    %1081 = vmatpush1.bf16.msra.mxu0 %v931
    %1082 = vmatprep.subr.bf16.mxu0 %v924
    %1083 = vmatpush1.bf16.msra.mxu0 %v923
    %1084 = vmatprep.subr.bf16.mxu0 0
    %1085 = vmatpush2.bf16.msra.mxu0 0
    %1086 = vmatprep.subr.bf16.mxu0 0
    %1087 = vmatpush2.bf16.msra.mxu0 0
    %1088 = vmatprep.subr.bf16.mxu0 0
    %1089 = vmatpush2.bf16.msra.mxu0 0
    %1090 = vmatprep.subr.bf16.mxu0 0
    %1091 = vmatpush2.bf16.msra.mxu0 0
    %1092 = vmatprep.subr.bf16.mxu0 0
    %1093 = vmatpush2.bf16.msra.mxu0 0
    %1094 = vmatprep.subr.bf16.mxu0 0
    %1095 = vmatpush2.bf16.msra.mxu0 0
    %1096 = vmatprep.subr.bf16.mxu0 0
    %1097 = vmatpush2.bf16.msra.mxu0 0
    %1098 = vmatprep.subr.bf16.mxu0 0
    %1099 = vmatpush2.bf16.msra.mxu0 0
    %1100 = vmatprep.mubr.bf16.mxu0 0
    %1101 = vmatmul.mubr.bf16.gmra.mxu0 %v792
    %v1102 = vpop.f32.mrf.mxu0
    %v1103 = vadd.f32 %v998, %v1102
    %v1104 = vpop.f32.mrf.mxu0
    %v1105 = vadd.f32 %v1002, %v1104
    %v1106 = vpop.f32.mrf.mxu0
    %v1107 = vpop.f32.mrf.mxu0
    %1108 = vdwg.mxu0
    %1109 = vmatprep.subr.bf16.mxu0 %v982
    %1110 = vmatpush1.bf16.msra.mxu0 %v981
    %1111 = vmatprep.subr.bf16.mxu0 %v974
    %1112 = vmatpush1.bf16.msra.mxu0 %v973
    %1113 = vmatprep.subr.bf16.mxu0 %v966
    %1114 = vmatpush1.bf16.msra.mxu0 %v965
    %1115 = vmatprep.subr.bf16.mxu0 %v958
    %1116 = vmatpush1.bf16.msra.mxu0 %v957
    %1117 = vmatprep.subr.bf16.mxu0 %v950
    %1118 = vmatpush1.bf16.msra.mxu0 %v949
    %1119 = vmatprep.subr.bf16.mxu0 %v942
    %1120 = vmatpush1.bf16.msra.mxu0 %v941
    %1121 = vmatprep.subr.bf16.mxu0 %v934
    %1122 = vmatpush1.bf16.msra.mxu0 %v933
    %1123 = vmatprep.subr.bf16.mxu0 %v926
    %1124 = vmatpush1.bf16.msra.mxu0 %v925
    %1125 = vmatprep.subr.bf16.mxu0 0
    %1126 = vmatpush2.bf16.msra.mxu0 0
    %1127 = vmatprep.subr.bf16.mxu0 0
    %1128 = vmatpush2.bf16.msra.mxu0 0
    %1129 = vmatprep.subr.bf16.mxu0 0
    %1130 = vmatpush2.bf16.msra.mxu0 0
    %1131 = vmatprep.subr.bf16.mxu0 0
    %1132 = vmatpush2.bf16.msra.mxu0 0
    %1133 = vmatprep.subr.bf16.mxu0 0
    %1134 = vmatpush2.bf16.msra.mxu0 0
    %1135 = vmatprep.subr.bf16.mxu0 0
    %1136 = vmatpush2.bf16.msra.mxu0 0
    %1137 = vmatprep.subr.bf16.mxu0 0
    %1138 = vmatpush2.bf16.msra.mxu0 0
    %1139 = vmatprep.subr.bf16.mxu0 0
    %1140 = vmatpush2.bf16.msra.mxu0 0
    %1141 = vmatprep.mubr.bf16.mxu0 0
    %1142 = vmatmul.mubr.bf16.gmra.mxu0 %v792
    %v1143 = vpop.f32.mrf.mxu0
    %v1144 = vadd.f32 %v1006, %v1143
    %v1145 = vpop.f32.mrf.mxu0
    %v1146 = vadd.f32 %v1010, %v1145
    %v1147 = vpop.f32.mrf.mxu0
    %v1148 = vpop.f32.mrf.mxu0
    %1149 = vdwg.mxu0
    %1150 = vmatprep.subr.bf16.mxu0 %v984
    %1151 = vmatpush1.bf16.msra.mxu0 %v983
    %1152 = vmatprep.subr.bf16.mxu0 %v976
    %1153 = vmatpush1.bf16.msra.mxu0 %v975
    %1154 = vmatprep.subr.bf16.mxu0 %v968
    %1155 = vmatpush1.bf16.msra.mxu0 %v967
    %1156 = vmatprep.subr.bf16.mxu0 %v960
    %1157 = vmatpush1.bf16.msra.mxu0 %v959
    %1158 = vmatprep.subr.bf16.mxu0 %v952
    %1159 = vmatpush1.bf16.msra.mxu0 %v951
    %1160 = vmatprep.subr.bf16.mxu0 %v944
    %1161 = vmatpush1.bf16.msra.mxu0 %v943
    %1162 = vmatprep.subr.bf16.mxu0 %v936
    %1163 = vmatpush1.bf16.msra.mxu0 %v935
    %1164 = vmatprep.subr.bf16.mxu0 %v928
    %1165 = vmatpush1.bf16.msra.mxu0 %v927
    %1166 = vmatprep.subr.bf16.mxu0 0
    %1167 = vmatpush2.bf16.msra.mxu0 0
    %1168 = vmatprep.subr.bf16.mxu0 0
    %1169 = vmatpush2.bf16.msra.mxu0 0
    %1170 = vmatprep.subr.bf16.mxu0 0
    %1171 = vmatpush2.bf16.msra.mxu0 0
    %1172 = vmatprep.subr.bf16.mxu0 0
    %1173 = vmatpush2.bf16.msra.mxu0 0
    %1174 = vmatprep.subr.bf16.mxu0 0
    %1175 = vmatpush2.bf16.msra.mxu0 0
    %1176 = vmatprep.subr.bf16.mxu0 0
    %1177 = vmatpush2.bf16.msra.mxu0 0
    %1178 = vmatprep.subr.bf16.mxu0 0
    %1179 = vmatpush2.bf16.msra.mxu0 0
    %1180 = vmatprep.subr.bf16.mxu0 0
    %1181 = vmatpush2.bf16.msra.mxu0 0
    %1182 = vmatprep.mubr.bf16.mxu0 0
    %1183 = vmatmul.mubr.bf16.gmra.mxu0 %v792
    %v1184 = vpop.f32.mrf.mxu0
    %v1185 = vadd.f32 %v1014, %v1184
    %v1186 = vpop.f32.mrf.mxu0
    %v1187 = vadd.f32 %v1018, %v1186
    %v1188 = vpop.f32.mrf.mxu0
    %v1189 = vpop.f32.mrf.mxu0
    %1190 = vdwg.mxu0
    %v1191 = vmax.f32 %v1062, 0.0
    %v1192 = vmax.f32 %v1064, 0.0
    %v1193 = vmax.f32 %v1103, 0.0
    %v1194 = vmax.f32 %v1105, 0.0
    %v1195 = vmax.f32 %v1144, 0.0
    %v1196 = vmax.f32 %v1146, 0.0
    %v1197 = vmax.f32 %v1185, 0.0
    %v1198 = vmax.f32 %v1187, 0.0
    %v1199 = vpack.c.bf16 %v1191, %v1191
    %v1200 = vpack.c.bf16 %v1192, %v1192
    %v1201 = vpack.c.bf16 %v1193, %v1193
    %v1202 = vpack.c.bf16 %v1194, %v1194
    %v1203 = vpack.c.bf16 %v1195, %v1195
    %v1204 = vpack.c.bf16 %v1196, %v1196
    %v1205 = vpack.c.bf16 %v1197, %v1197
    %v1206 = vpack.c.bf16 %v1198, %v1198
    %v1207 = vld [vmem:[#allocation8] sm:$0xff]
    %v1208 = vld [vmem:[#allocation8 + $0x8] sm:$0xff]
    %v1209 = vld [vmem:[#allocation8 + $0x10] sm:$0xff]
    %v1210 = vld [vmem:[#allocation8 + $0x18] sm:$0xff]
    %v1211 = vld [vmem:[#allocation8 + $0x20] sm:$0xff]
    %v1212 = vld [vmem:[#allocation8 + $0x28] sm:$0xff]
    %v1213 = vld [vmem:[#allocation8 + $0x30] sm:$0xff]
    %v1214 = vld [vmem:[#allocation8 + $0x38] sm:$0xff]
    %v1215 = vld [vmem:[#allocation8 + $0x40] sm:$0xff]
    %v1216 = vld [vmem:[#allocation8 + $0x48] sm:$0xff]
    %v1217 = vld [vmem:[#allocation8 + $0x50] sm:$0xff]
    %v1218 = vld [vmem:[#allocation8 + $0x58] sm:$0xff]
    %v1219 = vld [vmem:[#allocation8 + $0x60] sm:$0xff]
    %v1220 = vld [vmem:[#allocation8 + $0x68] sm:$0xff]
    %v1221 = vld [vmem:[#allocation8 + $0x70] sm:$0xff]
    %v1222 = vld [vmem:[#allocation8 + $0x78] sm:$0xff]
    %v1223 = vld [vmem:[#allocation8 + $0x80] sm:$0xff]
    %v1224 = vld [vmem:[#allocation8 + $0x88] sm:$0xff]
    %v1225 = vld [vmem:[#allocation8 + $0x90] sm:$0xff]
    %v1226 = vld [vmem:[#allocation8 + $0x98] sm:$0xff]
    %v1227 = vld [vmem:[#allocation8 + $0xa0] sm:$0xff]
    %v1228 = vld [vmem:[#allocation8 + $0xa8] sm:$0xff]
    %v1229 = vld [vmem:[#allocation8 + $0xb0] sm:$0xff]
    %v1230 = vld [vmem:[#allocation8 + $0xb8] sm:$0xff]
    %v1231 = vld [vmem:[#allocation8 + $0xc0] sm:$0xff]
    %v1232 = vld [vmem:[#allocation8 + $0xc8] sm:$0xff]
    %v1233 = vld [vmem:[#allocation8 + $0xd0] sm:$0xff]
    %v1234 = vld [vmem:[#allocation8 + $0xd8] sm:$0xff]
    %v1235 = vld [vmem:[#allocation8 + $0xe0] sm:$0xff]
    %v1236 = vld [vmem:[#allocation8 + $0xe8] sm:$0xff]
    %v1237 = vld [vmem:[#allocation8 + $0xf0] sm:$0xff]
    %v1238 = vld [vmem:[#allocation8 + $0xf8] sm:$0xff]
    %v1239 = vld [vmem:[#allocation8 + $0x100] sm:$0xff]
    %v1240 = vld [vmem:[#allocation8 + $0x108] sm:$0xff]
    %v1241 = vld [vmem:[#allocation8 + $0x110] sm:$0xff]
    %v1242 = vld [vmem:[#allocation8 + $0x118] sm:$0xff]
    %v1243 = vld [vmem:[#allocation8 + $0x120] sm:$0xff]
    %v1244 = vld [vmem:[#allocation8 + $0x128] sm:$0xff]
    %v1245 = vld [vmem:[#allocation8 + $0x130] sm:$0xff]
    %v1246 = vld [vmem:[#allocation8 + $0x138] sm:$0xff]
    %v1247 = vld [vmem:[#allocation8 + $0x140] sm:$0xff]
    %v1248 = vld [vmem:[#allocation8 + $0x148] sm:$0xff]
    %v1249 = vld [vmem:[#allocation8 + $0x150] sm:$0xff]
    %v1250 = vld [vmem:[#allocation8 + $0x158] sm:$0xff]
    %v1251 = vld [vmem:[#allocation8 + $0x160] sm:$0xff]
    %v1252 = vld [vmem:[#allocation8 + $0x168] sm:$0xff]
    %v1253 = vld [vmem:[#allocation8 + $0x170] sm:$0xff]
    %v1254 = vld [vmem:[#allocation8 + $0x178] sm:$0xff]
    %v1255 = vld [vmem:[#allocation8 + $0x180] sm:$0xff]
    %v1256 = vld [vmem:[#allocation8 + $0x188] sm:$0xff]
    %v1257 = vld [vmem:[#allocation8 + $0x190] sm:$0xff]
    %v1258 = vld [vmem:[#allocation8 + $0x198] sm:$0xff]
    %v1259 = vld [vmem:[#allocation8 + $0x1a0] sm:$0xff]
    %v1260 = vld [vmem:[#allocation8 + $0x1a8] sm:$0xff]
    %v1261 = vld [vmem:[#allocation8 + $0x1b0] sm:$0xff]
    %v1262 = vld [vmem:[#allocation8 + $0x1b8] sm:$0xff]
    %v1263 = vld [vmem:[#allocation8 + $0x1c0] sm:$0xff]
    %v1264 = vld [vmem:[#allocation8 + $0x1c8] sm:$0xff]
    %v1265 = vld [vmem:[#allocation8 + $0x1d0] sm:$0xff]
    %v1266 = vld [vmem:[#allocation8 + $0x1d8] sm:$0xff]
    %v1267 = vld [vmem:[#allocation8 + $0x1e0] sm:$0xff]
    %v1268 = vld [vmem:[#allocation8 + $0x1e8] sm:$0xff]
    %v1269 = vld [vmem:[#allocation8 + $0x1f0] sm:$0xff]
    %v1270 = vld [vmem:[#allocation8 + $0x1f8] sm:$0xff]
    %v1271 = vld [vmem:[#allocation8 + $0x200] sm:$0xff]
    %v1272 = vld [vmem:[#allocation8 + $0x208] sm:$0xff]
    %v1273 = vld [vmem:[#allocation8 + $0x210] sm:$0xff]
    %v1274 = vld [vmem:[#allocation8 + $0x218] sm:$0xff]
    %v1275 = vld [vmem:[#allocation8 + $0x220] sm:$0xff]
    %v1276 = vld [vmem:[#allocation8 + $0x228] sm:$0xff]
    %v1277 = vld [vmem:[#allocation8 + $0x230] sm:$0xff]
    %v1278 = vld [vmem:[#allocation8 + $0x238] sm:$0xff]
    %v1279 = vld [vmem:[#allocation8 + $0x240] sm:$0xff]
    %v1280 = vld [vmem:[#allocation8 + $0x248] sm:$0xff]
    %v1281 = vld [vmem:[#allocation8 + $0x250] sm:$0xff]
    %v1282 = vld [vmem:[#allocation8 + $0x258] sm:$0xff]
    %v1283 = vld [vmem:[#allocation8 + $0x260] sm:$0xff]
    %v1284 = vld [vmem:[#allocation8 + $0x268] sm:$0xff]
    %v1285 = vld [vmem:[#allocation8 + $0x270] sm:$0xff]
    %v1286 = vld [vmem:[#allocation8 + $0x278] sm:$0xff]
    %v1287 = vld [vmem:[#allocation8 + $0x280] sm:$0xff]
    %v1288 = vld [vmem:[#allocation8 + $0x288] sm:$0xff]
    %v1289 = vld [vmem:[#allocation8 + $0x290] sm:$0xff]
    %v1290 = vld [vmem:[#allocation8 + $0x298] sm:$0xff]
    %v1291 = vld [vmem:[#allocation8 + $0x2a0] sm:$0xff]
    %v1292 = vld [vmem:[#allocation8 + $0x2a8] sm:$0xff]
    %v1293 = vld [vmem:[#allocation8 + $0x2b0] sm:$0xff]
    %v1294 = vld [vmem:[#allocation8 + $0x2b8] sm:$0xff]
    %v1295 = vld [vmem:[#allocation8 + $0x2c0] sm:$0xff]
    %v1296 = vld [vmem:[#allocation8 + $0x2c8] sm:$0xff]
    %v1297 = vld [vmem:[#allocation8 + $0x2d0] sm:$0xff]
    %v1298 = vld [vmem:[#allocation8 + $0x2d8] sm:$0xff]
    %v1299 = vld [vmem:[#allocation8 + $0x2e0] sm:$0xff]
    %v1300 = vld [vmem:[#allocation8 + $0x2e8] sm:$0xff]
    %v1301 = vld [vmem:[#allocation8 + $0x2f0] sm:$0xff]
    %v1302 = vld [vmem:[#allocation8 + $0x2f8] sm:$0xff]
    %v1303 = vld [vmem:[#allocation8 + $0x300] sm:$0xff]
    %v1304 = vld [vmem:[#allocation8 + $0x308] sm:$0xff]
    %v1305 = vld [vmem:[#allocation8 + $0x310] sm:$0xff]
    %v1306 = vld [vmem:[#allocation8 + $0x318] sm:$0xff]
    %v1307 = vld [vmem:[#allocation8 + $0x320] sm:$0xff]
    %v1308 = vld [vmem:[#allocation8 + $0x328] sm:$0xff]
    %v1309 = vld [vmem:[#allocation8 + $0x330] sm:$0xff]
    %v1310 = vld [vmem:[#allocation8 + $0x338] sm:$0xff]
    %v1311 = vld [vmem:[#allocation8 + $0x340] sm:$0xff]
    %v1312 = vld [vmem:[#allocation8 + $0x348] sm:$0xff]
    %v1313 = vld [vmem:[#allocation8 + $0x350] sm:$0xff]
    %v1314 = vld [vmem:[#allocation8 + $0x358] sm:$0xff]
    %v1315 = vld [vmem:[#allocation8 + $0x360] sm:$0xff]
    %v1316 = vld [vmem:[#allocation8 + $0x368] sm:$0xff]
    %v1317 = vld [vmem:[#allocation8 + $0x370] sm:$0xff]
    %v1318 = vld [vmem:[#allocation8 + $0x378] sm:$0xff]
    %v1319 = vld [vmem:[#allocation8 + $0x380] sm:$0xff]
    %v1320 = vld [vmem:[#allocation8 + $0x388] sm:$0xff]
    %v1321 = vld [vmem:[#allocation8 + $0x390] sm:$0xff]
    %v1322 = vld [vmem:[#allocation8 + $0x398] sm:$0xff]
    %v1323 = vld [vmem:[#allocation8 + $0x3a0] sm:$0xff]
    %v1324 = vld [vmem:[#allocation8 + $0x3a8] sm:$0xff]
    %v1325 = vld [vmem:[#allocation8 + $0x3b0] sm:$0xff]
    %v1326 = vld [vmem:[#allocation8 + $0x3b8] sm:$0xff]
    %v1327 = vld [vmem:[#allocation8 + $0x3c0] sm:$0xff]
    %v1328 = vld [vmem:[#allocation8 + $0x3c8] sm:$0xff]
    %v1329 = vld [vmem:[#allocation8 + $0x3d0] sm:$0xff]
    %v1330 = vld [vmem:[#allocation8 + $0x3d8] sm:$0xff]
    %v1331 = vld [vmem:[#allocation8 + $0x3e0] sm:$0xff]
    %v1332 = vld [vmem:[#allocation8 + $0x3e8] sm:$0xff]
    %v1333 = vld [vmem:[#allocation8 + $0x3f0] sm:$0xff]
    %v1334 = vld [vmem:[#allocation8 + $0x3f8] sm:$0xff]
    %v1335 = vpack.c.bf16 %v1208, %v1207
    %v1336 = vpack.c.bf16 %v1210, %v1209
    %v1337 = vpack.c.bf16 %v1212, %v1211
    %v1338 = vpack.c.bf16 %v1214, %v1213
    %v1339 = vpack.c.bf16 %v1216, %v1215
    %v1340 = vpack.c.bf16 %v1218, %v1217
    %v1341 = vpack.c.bf16 %v1220, %v1219
    %v1342 = vpack.c.bf16 %v1222, %v1221
    %v1343 = vpack.c.bf16 %v1224, %v1223
    %v1344 = vpack.c.bf16 %v1226, %v1225
    %v1345 = vpack.c.bf16 %v1228, %v1227
    %v1346 = vpack.c.bf16 %v1230, %v1229
    %v1347 = vpack.c.bf16 %v1232, %v1231
    %v1348 = vpack.c.bf16 %v1234, %v1233
    %v1349 = vpack.c.bf16 %v1236, %v1235
    %v1350 = vpack.c.bf16 %v1238, %v1237
    %v1351 = vpack.c.bf16 %v1240, %v1239
    %v1352 = vpack.c.bf16 %v1242, %v1241
    %v1353 = vpack.c.bf16 %v1244, %v1243
    %v1354 = vpack.c.bf16 %v1246, %v1245
    %v1355 = vpack.c.bf16 %v1248, %v1247
    %v1356 = vpack.c.bf16 %v1250, %v1249
    %v1357 = vpack.c.bf16 %v1252, %v1251
    %v1358 = vpack.c.bf16 %v1254, %v1253
    %v1359 = vpack.c.bf16 %v1256, %v1255
    %v1360 = vpack.c.bf16 %v1258, %v1257
    %v1361 = vpack.c.bf16 %v1260, %v1259
    %v1362 = vpack.c.bf16 %v1262, %v1261
    %v1363 = vpack.c.bf16 %v1264, %v1263
    %v1364 = vpack.c.bf16 %v1266, %v1265
    %v1365 = vpack.c.bf16 %v1268, %v1267
    %v1366 = vpack.c.bf16 %v1270, %v1269
    %v1367 = vpack.c.bf16 %v1272, %v1271
    %v1368 = vpack.c.bf16 %v1274, %v1273
    %v1369 = vpack.c.bf16 %v1276, %v1275
    %v1370 = vpack.c.bf16 %v1278, %v1277
    %v1371 = vpack.c.bf16 %v1280, %v1279
    %v1372 = vpack.c.bf16 %v1282, %v1281
    %v1373 = vpack.c.bf16 %v1284, %v1283
    %v1374 = vpack.c.bf16 %v1286, %v1285
    %v1375 = vpack.c.bf16 %v1288, %v1287
    %v1376 = vpack.c.bf16 %v1290, %v1289
    %v1377 = vpack.c.bf16 %v1292, %v1291
    %v1378 = vpack.c.bf16 %v1294, %v1293
    %v1379 = vpack.c.bf16 %v1296, %v1295
    %v1380 = vpack.c.bf16 %v1298, %v1297
    %v1381 = vpack.c.bf16 %v1300, %v1299
    %v1382 = vpack.c.bf16 %v1302, %v1301
    %v1383 = vpack.c.bf16 %v1304, %v1303
    %v1384 = vpack.c.bf16 %v1306, %v1305
    %v1385 = vpack.c.bf16 %v1308, %v1307
    %v1386 = vpack.c.bf16 %v1310, %v1309
    %v1387 = vpack.c.bf16 %v1312, %v1311
    %v1388 = vpack.c.bf16 %v1314, %v1313
    %v1389 = vpack.c.bf16 %v1316, %v1315
    %v1390 = vpack.c.bf16 %v1318, %v1317
    %v1391 = vpack.c.bf16 %v1320, %v1319
    %v1392 = vpack.c.bf16 %v1322, %v1321
    %v1393 = vpack.c.bf16 %v1324, %v1323
    %v1394 = vpack.c.bf16 %v1326, %v1325
    %v1395 = vpack.c.bf16 %v1328, %v1327
    %v1396 = vpack.c.bf16 %v1330, %v1329
    %v1397 = vpack.c.bf16 %v1332, %v1331
    %v1398 = vpack.c.bf16 %v1334, %v1333
    %v1399 = vld [vmem:[%s12] sm:$0x1]
    %v1401 = vlaneseq
    %v1402 = vshrl.u32 %v1401, 7
    %v1403 = vsub.s32 0, %v1402
    %v1404 = vrot.slane %v1399, %v1403
    %1406 = vmatprep.subr.bf16.mxu0 0
    %1407 = vmatpush1.bf16.msra.mxu0 %v1342
    %1408 = vmatprep.subr.bf16.mxu0 0
    %1409 = vmatpush1.bf16.msra.mxu0 %v1341
    %1410 = vmatprep.subr.bf16.mxu0 0
    %1411 = vmatpush1.bf16.msra.mxu0 %v1340
    %1412 = vmatprep.subr.bf16.mxu0 0
    %1413 = vmatpush1.bf16.msra.mxu0 %v1339
    %1414 = vmatprep.subr.bf16.mxu0 0
    %1415 = vmatpush1.bf16.msra.mxu0 %v1338
    %1416 = vmatprep.subr.bf16.mxu0 0
    %1417 = vmatpush1.bf16.msra.mxu0 %v1337
    %1418 = vmatprep.subr.bf16.mxu0 0
    %1419 = vmatpush1.bf16.msra.mxu0 %v1336
    %1420 = vmatprep.subr.bf16.mxu0 0
    %1421 = vmatpush1.bf16.msra.mxu0 %v1335
    %1422 = vmatprep.subr.bf16.mxu0 0
    %1423 = vmatpush2.bf16.msra.mxu0 %v1350
    %1424 = vmatprep.subr.bf16.mxu0 0
    %1425 = vmatpush2.bf16.msra.mxu0 %v1349
    %1426 = vmatprep.subr.bf16.mxu0 0
    %1427 = vmatpush2.bf16.msra.mxu0 %v1348
    %1428 = vmatprep.subr.bf16.mxu0 0
    %1429 = vmatpush2.bf16.msra.mxu0 %v1347
    %1430 = vmatprep.subr.bf16.mxu0 0
    %1431 = vmatpush2.bf16.msra.mxu0 %v1346
    %1432 = vmatprep.subr.bf16.mxu0 0
    %1433 = vmatpush2.bf16.msra.mxu0 %v1345
    %1434 = vmatprep.subr.bf16.mxu0 0
    %1435 = vmatpush2.bf16.msra.mxu0 %v1344
    %1436 = vmatprep.subr.bf16.mxu0 0
    %1437 = vmatpush2.bf16.msra.mxu0 %v1343
    %1438 = vmatprep.mubr.bf16.mxu0 %v1200
    %1439 = vmatmul.mubr.bf16.gmra.mxu0 %v1199
    %v1440 = vpop.f32.mrf.mxu0
    %v1441 = vadd.f32 %v1404, %v1440
    %v1442 = vpop.f32.mrf.mxu0
    %v1443 = vpop.f32.mrf.mxu0
    %v1444 = vpop.f32.mrf.mxu0
    %1445 = vdwg.mxu0
    %1446 = vmatprep.subr.bf16.mxu0 0
    %1447 = vmatpush1.bf16.msra.mxu0 %v1358
    %1448 = vmatprep.subr.bf16.mxu0 0
    %1449 = vmatpush1.bf16.msra.mxu0 %v1357
    %1450 = vmatprep.subr.bf16.mxu0 0
    %1451 = vmatpush1.bf16.msra.mxu0 %v1356
    %1452 = vmatprep.subr.bf16.mxu0 0
    %1453 = vmatpush1.bf16.msra.mxu0 %v1355
    %1454 = vmatprep.subr.bf16.mxu0 0
    %1455 = vmatpush1.bf16.msra.mxu0 %v1354
    %1456 = vmatprep.subr.bf16.mxu0 0
    %1457 = vmatpush1.bf16.msra.mxu0 %v1353
    %1458 = vmatprep.subr.bf16.mxu0 0
    %1459 = vmatpush1.bf16.msra.mxu0 %v1352
    %1460 = vmatprep.subr.bf16.mxu0 0
    %1461 = vmatpush1.bf16.msra.mxu0 %v1351
    %1462 = vmatprep.subr.bf16.mxu0 0
    %1463 = vmatpush2.bf16.msra.mxu0 %v1366
    %1464 = vmatprep.subr.bf16.mxu0 0
    %1465 = vmatpush2.bf16.msra.mxu0 %v1365
    %1466 = vmatprep.subr.bf16.mxu0 0
    %1467 = vmatpush2.bf16.msra.mxu0 %v1364
    %1468 = vmatprep.subr.bf16.mxu0 0
    %1469 = vmatpush2.bf16.msra.mxu0 %v1363
    %1470 = vmatprep.subr.bf16.mxu0 0
    %1471 = vmatpush2.bf16.msra.mxu0 %v1362
    %1472 = vmatprep.subr.bf16.mxu0 0
    %1473 = vmatpush2.bf16.msra.mxu0 %v1361
    %1474 = vmatprep.subr.bf16.mxu0 0
    %1475 = vmatpush2.bf16.msra.mxu0 %v1360
    %1476 = vmatprep.subr.bf16.mxu0 0
    %1477 = vmatpush2.bf16.msra.mxu0 %v1359
    %1478 = vmatprep.mubr.bf16.mxu0 %v1202
    %1479 = vmatmul.mubr.bf16.gmra.mxu0 %v1201
    %v1480 = vpop.f32.mrf.mxu0
    %v1481 = vadd.f32 %v1441, %v1480
    %v1482 = vpop.f32.mrf.mxu0
    %v1483 = vpop.f32.mrf.mxu0
    %v1484 = vpop.f32.mrf.mxu0
    %1485 = vdwg.mxu0
    %1486 = vmatprep.subr.bf16.mxu0 0
    %1487 = vmatpush1.bf16.msra.mxu0 %v1374
    %1488 = vmatprep.subr.bf16.mxu0 0
    %1489 = vmatpush1.bf16.msra.mxu0 %v1373
    %1490 = vmatprep.subr.bf16.mxu0 0
    %1491 = vmatpush1.bf16.msra.mxu0 %v1372
    %1492 = vmatprep.subr.bf16.mxu0 0
    %1493 = vmatpush1.bf16.msra.mxu0 %v1371
    %1494 = vmatprep.subr.bf16.mxu0 0
    %1495 = vmatpush1.bf16.msra.mxu0 %v1370
    %1496 = vmatprep.subr.bf16.mxu0 0
    %1497 = vmatpush1.bf16.msra.mxu0 %v1369
    %1498 = vmatprep.subr.bf16.mxu0 0
    %1499 = vmatpush1.bf16.msra.mxu0 %v1368
    %1500 = vmatprep.subr.bf16.mxu0 0
    %1501 = vmatpush1.bf16.msra.mxu0 %v1367
    %1502 = vmatprep.subr.bf16.mxu0 0
    %1503 = vmatpush2.bf16.msra.mxu0 %v1382
    %1504 = vmatprep.subr.bf16.mxu0 0
    %1505 = vmatpush2.bf16.msra.mxu0 %v1381
    %1506 = vmatprep.subr.bf16.mxu0 0
    %1507 = vmatpush2.bf16.msra.mxu0 %v1380
    %1508 = vmatprep.subr.bf16.mxu0 0
    %1509 = vmatpush2.bf16.msra.mxu0 %v1379
    %1510 = vmatprep.subr.bf16.mxu0 0
    %1511 = vmatpush2.bf16.msra.mxu0 %v1378
    %1512 = vmatprep.subr.bf16.mxu0 0
    %1513 = vmatpush2.bf16.msra.mxu0 %v1377
    %1514 = vmatprep.subr.bf16.mxu0 0
    %1515 = vmatpush2.bf16.msra.mxu0 %v1376
    %1516 = vmatprep.subr.bf16.mxu0 0
    %1517 = vmatpush2.bf16.msra.mxu0 %v1375
    %1518 = vmatprep.mubr.bf16.mxu0 %v1204
    %1519 = vmatmul.mubr.bf16.gmra.mxu0 %v1203
    %v1520 = vpop.f32.mrf.mxu0
    %v1521 = vadd.f32 %v1481, %v1520
    %v1522 = vpop.f32.mrf.mxu0
    %v1523 = vpop.f32.mrf.mxu0
    %v1524 = vpop.f32.mrf.mxu0
    %1525 = vdwg.mxu0
    %1526 = vmatprep.subr.bf16.mxu0 0
    %1527 = vmatpush1.bf16.msra.mxu0 %v1390
    %1528 = vmatprep.subr.bf16.mxu0 0
    %1529 = vmatpush1.bf16.msra.mxu0 %v1389
    %1530 = vmatprep.subr.bf16.mxu0 0
    %1531 = vmatpush1.bf16.msra.mxu0 %v1388
    %1532 = vmatprep.subr.bf16.mxu0 0
    %1533 = vmatpush1.bf16.msra.mxu0 %v1387
    %1534 = vmatprep.subr.bf16.mxu0 0
    %1535 = vmatpush1.bf16.msra.mxu0 %v1386
    %1536 = vmatprep.subr.bf16.mxu0 0
    %1537 = vmatpush1.bf16.msra.mxu0 %v1385
    %1538 = vmatprep.subr.bf16.mxu0 0
    %1539 = vmatpush1.bf16.msra.mxu0 %v1384
    %1540 = vmatprep.subr.bf16.mxu0 0
    %1541 = vmatpush1.bf16.msra.mxu0 %v1383
    %1542 = vmatprep.subr.bf16.mxu0 0
    %1543 = vmatpush2.bf16.msra.mxu0 %v1398
    %1544 = vmatprep.subr.bf16.mxu0 0
    %1545 = vmatpush2.bf16.msra.mxu0 %v1397
    %1546 = vmatprep.subr.bf16.mxu0 0
    %1547 = vmatpush2.bf16.msra.mxu0 %v1396
    %1548 = vmatprep.subr.bf16.mxu0 0
    %1549 = vmatpush2.bf16.msra.mxu0 %v1395
    %1550 = vmatprep.subr.bf16.mxu0 0
    %1551 = vmatpush2.bf16.msra.mxu0 %v1394
    %1552 = vmatprep.subr.bf16.mxu0 0
    %1553 = vmatpush2.bf16.msra.mxu0 %v1393
    %1554 = vmatprep.subr.bf16.mxu0 0
    %1555 = vmatpush2.bf16.msra.mxu0 %v1392
    %1556 = vmatprep.subr.bf16.mxu0 0
    %1557 = vmatpush2.bf16.msra.mxu0 %v1391
    %1558 = vmatprep.mubr.bf16.mxu0 %v1206
    %1559 = vmatmul.mubr.bf16.gmra.mxu0 %v1205
    %v1560 = vpop.f32.mrf.mxu0
    %v1561 = vadd.f32 %v1521, %v1560
    %v1562 = vpop.f32.mrf.mxu0
    %v1563 = vpop.f32.mrf.mxu0
    %v1564 = vpop.f32.mrf.mxu0
    %1565 = vdwg.mxu0
    %1566 = vst [vmem:[#allocation10] sm:$0x3] %v1561
    // Predicated region
    $region70: #{tpu_custom_call.1} parent=1 // pred_check
      _
    $region71: #{tpu_custom_call.1} parent=1 // pred_check_branch
      %1568 = sbr.rel (0) target = $region73
    $region72: #{tpu_custom_call.1} parent=1 // pred_region
      %s1570 = ssub.s32 32, 32
      %1571 = vsyncadd [#allocation4], %s1570
      %s1573 = sshll.u32 [#allocation10], 4
      %s1574 = int_to_ptr.vmem [resolvable:$true] %s1573
      %1576 = dma.vmem_to_hbm [thread:$0]  %s1574, 32, %s13, [#allocation4]
    $region73: #{tpu_custom_call.1} parent=1 // pred_fallthru
      _
    // Predicated region
    $region74: #{tpu_custom_call.1} parent=1 // pred_check
      _
    $region75: #{tpu_custom_call.1} parent=1 // pred_check_branch
      %1578 = sbr.rel (0) target = $region77
    $region76: #{tpu_custom_call.1} parent=1 // pred_region
      %1579 = dma.done [#allocation4], 32
    $region77: #{tpu_custom_call.1} parent=1 // pred_fallthru
      _
    %1580 = vsyncpa [#allocation3], 1
    %1581 = vsyncpa [#allocation6], 1
    %1582 = vsyncpa [#allocation9], 1
    %1583 = vsyncpa [#allocation4], 1

</llo_original>
